<compile_context>
chip_gen: v6e
topology: v6e:2x2x1
jax: 0.10.0
libtpu: 0.0.40
codegen_flags: <defaults>
</compile_context>

<pallas_src>
import functools

import jax
import jax.numpy as jnp
from jax import lax
from jax.experimental import pallas as pl
from jax.experimental.pallas import tpu as pltpu


def _dwconv_kernel(x_ref, top_ref, bot_ref, w_ref, b_ref, o_ref, *,
                   TH, RG, Wp, P, Cpk):
    # x_ref  : (1, TH, Wp, L)  TH output rows of one (batch, lane-tile)
    # top_ref: (1, 1, Wp, L)   row just above the tile (clamped at the border)
    # bot_ref: (1, 1, Wp, L)   row just below the tile (clamped at the border)
    # w_ref  : (9, L)          flattened 3x3 taps per lane, [kh*3+kw, lane]
    # b_ref  : (1, L)          bias per lane
    # o_ref  : (1, TH, Wp, L)
    # Lane layout: lane = p*Cpk + c packs P consecutive W positions (p) of Cpk
    # channels (c); Wp = W // P sits on the sublane axis.
    f32 = jnp.float32
    h = pl.program_id(2)
    last_h = pl.num_programs(2) - 1
    L = x_ref.shape[-1]

    # ---- group-invariant values (hoisted out of the group loop) -------------
    # H-halo rows with fused zero padding.  Select (not multiply-by-0) so a
    # NaN/Inf in the clamped row cannot leak into border outputs.
    top = jnp.where(h > 0, top_ref[0, 0].astype(f32), 0.0)          # (Wp, L)
    bot = jnp.where(h < last_h, bot_ref[0, 0].astype(f32), 0.0)     # (Wp, L)

    w = w_ref[...].astype(f32)                                      # (9, L)
    taps = [w[k].reshape(1, 1, L) for k in range(9)]                # hoisted
    bias_b = b_ref[0].astype(f32).reshape(1, 1, L)                  # hoisted

    # Edge masks implementing the fused zero padding in W (kill roll wrap).
    wp_i = lax.broadcasted_iota(jnp.int32, (1, Wp, L), 1)
    if P > 1:
        ln_i = lax.broadcasted_iota(jnp.int32, (1, Wp, L), 2)
        is_p_first = ln_i < Cpk                 # first W position of a pack
        is_p_last = ln_i >= L - Cpk             # last W position of a pack
        left_edge = jnp.logical_and(wp_i == 0, is_p_first)
        right_edge = jnp.logical_and(wp_i == Wp - 1, is_p_last)
    else:
        left_edge = wp_i == 0
        right_edge = wp_i == Wp - 1

    def shift_w_left(t):
        # t holds left-tap partial sums per W position; return the value of the
        # W-left neighbour at every position, 0 at the global left edge.
        if P > 1:
            a = pltpu.roll(t, Cpk, axis=2)          # lane roll: pack pos p-1
            fix = pltpu.roll(a, 1, axis=1)          # previous packed column
            a = jnp.where(is_p_first, fix, a)
        else:
            a = pltpu.roll(t, 1, axis=1)            # sublane roll
        return jnp.where(left_edge, 0.0, a)

    def shift_w_right(t):
        if P > 1:
            a = pltpu.roll(t, L - Cpk, axis=2)      # lane roll: pack pos p+1
            fix = pltpu.roll(a, Wp - 1, axis=1)     # next packed column
            a = jnp.where(is_p_last, fix, a)
        else:
            a = pltpu.roll(t, Wp - 1, axis=1)
        return jnp.where(right_edge, 0.0, a)

    def compute_group(blks, r0):
        # blks[kh]: (RG, Wp, L) input rows r0+kh-1 .. r0+kh-1+RG-1.
        # Sum the three kw columns over kh first, then ONE roll + ONE edge
        # select per direction (roll commutes with the per-lane weight mul).
        c_sum = blks[0] * taps[1] + blks[1] * taps[4] + blks[2] * taps[7]
        l_sum = blks[0] * taps[0] + blks[1] * taps[3] + blks[2] * taps[6]
        r_sum = blks[0] * taps[2] + blks[1] * taps[5] + blks[2] * taps[8]
        acc = c_sum + shift_w_left(l_sum) + shift_w_right(r_sum) + bias_b
        o_ref[0, pl.ds(r0, RG)] = acc.astype(o_ref.dtype)   # one store/group

    def boundary_blks(r0):
        # r0 is a static Python int; rows -1 / TH come from the halo inputs.
        # (The concatenate copy is confined to the two boundary groups.)
        def rows(s0):
            lo, hi = max(s0, 0), min(s0 + RG, TH)
            parts = []
            if s0 < 0:
                parts.append(top[None])
            if hi > lo:
                parts.append(x_ref[0, lo:hi].astype(f32))
            if s0 + RG > TH:
                parts.append(bot[None])
            return parts[0] if len(parts) == 1 else jnp.concatenate(parts, axis=0)
        return tuple(rows(r0 + kh - 1) for kh in range(3))

    ngroups = TH // RG

    # First group (touches the top halo).
    compute_group(boundary_blks(0), 0)

    # Interior groups: uniform dynamic slices straight off the Ref; fori_loop
    # bounds vreg live ranges vs a fully unrolled Python loop.
    n_inner = ngroups - 2
    if n_inner > 0:
        def body(g, carry):
            r0 = pl.multiple_of(g * RG, RG)
            blks = tuple(x_ref[0, pl.ds(r0 + kh - 1, RG)].astype(f32)
                         for kh in range(3))
            compute_group(blks, r0)
            return carry

        unroll = True if n_inner <= 8 else next(
            d for d in (8, 4, 2, 1) if n_inner % d == 0)
        lax.fori_loop(1, ngroups - 1, body, 0, unroll=unroll)

    # Last group (touches the bottom halo).
    if ngroups > 1:
        compute_group(boundary_blks((ngroups - 1) * RG), (ngroups - 1) * RG)


def _pick_lane_packing(C, W):
    """W positions packed per 128-lane vreg (only when it reaches exactly 128
    lanes and keeps >= 8 packed W positions on the sublane axis)."""
    if C < 128 and 128 % C == 0:
        P = 128 // C
        if W % P == 0 and (W // P) % 8 == 0:
            return P
    return 1


def _pick_tiles(H, Wp, L, itemsize, min_h_tiles):
    """(row_tile, row_group): rows per grid step / rows per in-vreg accumulator.

    Body block capped at ~2 MiB: with double-buffered in+out the residency is
    ~4x that (~8 MiB) plus halos/weights, which fits v5e's 16 MiB scoped
    default and stays far below v7x's 64 MiB physical VMEM.
    """
    in_row_bytes = Wp * L * itemsize
    cap = 2 << 20
    max_th = max(H // max(min_h_tiles, 1), 1)
    row_tile = 1
    for cand in range(1, H + 1):
        if H % cand == 0 and cand <= max_th and cand * in_row_bytes <= cap:
            row_tile = cand
    row_group = 1
    for cand in range(1, row_tile + 1):
        if row_tile % cand == 0 and cand * Wp * L * 4 <= (32 << 10):
            row_group = cand
    return row_tile, row_group


def dwconv(x, weight, bias, H, W, *, row_tile=None, row_group=None):
    """Depthwise 3x3 conv, stride 1, padding 1, groups=C, with bias.

    x: (B, N, C) with N == H*W; weight: (C, 1, 3, 3); bias: (C,).
    Returns (B, N, C).
    """
    B, N, C = x.shape
    assert N == H * W

    # Lane packing of W for narrow-C stages; pure row-major metadata reshape.
    P = _pick_lane_packing(C, W)
    Wp = W // P
    CL = P * C
    x_p = x.reshape(B, H, Wp, CL)        # x_p[b,h,wp,p*C+c] == x[b, h*W+wp*P+p, c]

    # Lane tiling: 128-lane blocks when C is a multiple of 128, else full width.
    TCL = 128 if (P == 1 and C % 128 == 0) else CL
    nC = CL // TCL

    # Keep >= 2 H tiles when B*nC == 1 so the v7x megacore has parallel work.
    min_h_tiles = 1 if B * nC >= 2 else min(2, H)
    th, rg = _pick_tiles(H, Wp, TCL, x.dtype.itemsize, min_h_tiles)
    TH = row_tile if row_tile is not None else th
    RG = row_group if row_group is not None else rg
    assert H % TH == 0 and TH % RG == 0
    nH = H // TH

    # Weights/bias replicated per packed W position: lane p*C + c -> channel c.
    w_flat = weight.reshape(C, 9).T.astype(jnp.float32)            # (9, C)
    w_arr = jnp.tile(w_flat, (1, P))                               # (9, CL)
    b_arr = jnp.tile(bias.reshape(1, C).astype(jnp.float32), (1, P))  # (1, CL)

    kernel = functools.partial(_dwconv_kernel, TH=TH, RG=RG, Wp=Wp, P=P, Cpk=C)

    out_p = pl.pallas_call(
        kernel,
        out_shape=jax.ShapeDtypeStruct((B, H, Wp, CL), x.dtype),
        grid=(B, nC, nH),
        in_specs=[
            # TH-row body tile.
            pl.BlockSpec((1, TH, Wp, TCL), lambda b, c, h: (b, h, 0, c)),
            # 1-row halos just above/below the tile, clamped at the image
            # border (selected to zero in-kernel there).
            pl.BlockSpec((1, 1, Wp, TCL),
                         lambda b, c, h: (b, jnp.maximum(h * TH - 1, 0), 0, c)),
            pl.BlockSpec((1, 1, Wp, TCL),
                         lambda b, c, h: (b, jnp.minimum(h * TH + TH, H - 1), 0, c)),
            pl.BlockSpec((9, TCL), lambda b, c, h: (0, c)),
            pl.BlockSpec((1, TCL), lambda b, c, h: (0, c)),
        ],
        out_specs=pl.BlockSpec((1, TH, Wp, TCL), lambda b, c, h: (b, h, 0, c)),
        compiler_params=pltpu.CompilerParams(
            dimension_semantics=("parallel", "parallel", "parallel"),
            vmem_limit_bytes=32 << 20),
        cost_estimate=pl.CostEstimate(
            flops=2 * 9 * B * H * W * C,
            transcendentals=0,
            # body read + write + 2/TH halo re-reads + weights/bias
            bytes_accessed=int(B * H * W * C * x.dtype.itemsize * (2 + 2.0 / TH)
                               + 10 * CL * 4)),
    )(x_p, x_p, x_p, w_arr, b_arr)

    return out_p.reshape(B, N, C)


def _reference(x, weight, bias, H, W):
    """Pure-JAX reference (lax depthwise conv) for correctness check."""
    B, N, C = x.shape
    x_nhwc = x.reshape(B, H, W, C)
    rhs = jnp.transpose(weight, (2, 3, 1, 0))            # (3, 3, 1, C)  HWIO
    y = lax.conv_general_dilated(
        x_nhwc.astype(jnp.float32), rhs.astype(jnp.float32),
        window_strides=(1, 1), padding=((1, 1), (1, 1)),
        dimension_numbers=("NHWC", "HWIO", "NHWC"),
        feature_group_count=C,
    ) + bias.astype(jnp.float32)
    return y.reshape(B, N, C).astype(x.dtype)


if __name__ == "__main__":
    def make(B, C, H, W, dtype, salt):
        kx, kw, kb = jax.random.split(jax.random.fold_in(jax.random.PRNGKey(0), salt), 3)
        x = jax.random.normal(kx, (B, H * W, C), dtype=jnp.float32).astype(dtype)
        w = jax.random.normal(kw, (C, 1, 3, 3), dtype=jnp.float32) * 0.1
        b = jax.random.normal(kb, (C,), dtype=jnp.float32) * 0.1
        return x, w, b

    # Config A: small image -> unpacked fallback, single row group.
    B, C, H, W = 2, 32, 16, 16
    x, w, b = make(B, C, H, W, jnp.float32, 0)
    ref = _reference(x, w, b, H, W)
    out = jax.block_until_ready(dwconv(x, w, b, H, W))
    assert out.shape == (B, H * W, C)
    assert jnp.allclose(out, ref, atol=1e-4, rtol=1e-5), "mismatch (A)"

    # Config A forced tiling: multi-tile halos + fori_loop interior groups.
    out = jax.block_until_ready(dwconv(x, w, b, H, W, row_tile=8, row_group=2))
    assert jnp.allclose(out, ref, atol=1e-4, rtol=1e-5), "mismatch (A tiled)"

    # Config A in bf16: bf16 HBM traffic, f32 in-register accumulation.
    xb = x.astype(jnp.bfloat16)
    refb = _reference(xb, w, b, H, W).astype(jnp.float32)
    outb = jax.block_until_ready(dwconv(xb, w, b, H, W)).astype(jnp.float32)
    assert jnp.allclose(outb, refb, atol=5e-2, rtol=5e-2), "mismatch (A bf16)"

    # Config B: lane-packed path (C=32, P=4 -> 128 lanes); B=1 keeps >= 2 H tiles.
    B, C, H, W = 1, 32, 32, 32
    x, w, b = make(B, C, H, W, jnp.float32, 1)
    ref = _reference(x, w, b, H, W)
    out = jax.block_until_ready(dwconv(x, w, b, H, W))
    assert jnp.allclose(out, ref, atol=1e-4, rtol=1e-5), "mismatch (B)"
    # Forced tall tile: partially-unrolled fori_loop over 14 interior groups.
    out = jax.block_until_ready(dwconv(x, w, b, H, W, row_tile=32, row_group=2))
    assert jnp.allclose(out, ref, atol=1e-4, rtol=1e-5), "mismatch (B tiled)"

    # Config C: C >= 128 -> 128-lane channel tiling (nC = 2).
    B, C, H, W = 2, 256, 8, 8
    x, w, b = make(B, C, H, W, jnp.float32, 2)
    ref = _reference(x, w, b, H, W)
    out = jax.block_until_ready(dwconv(x, w, b, H, W))
    assert jnp.allclose(out, ref, atol=1e-4, rtol=1e-5), "mismatch (C)"

    print("KERNEL_OK")
</pallas_src>

<mosaic_0001>
module attributes {stable_mosaic.version = 11 : i64} {
  func.func @_dwconv_kernel(%arg0: i32, %arg1: i32, %arg2: i32, %arg3: memref<1x16x16x32xf32, #tpu.memory_space<vmem>>, %arg4: memref<1x1x16x32xf32, #tpu.memory_space<vmem>>, %arg5: memref<1x1x16x32xf32, #tpu.memory_space<vmem>>, %arg6: memref<9x32xf32, #tpu.memory_space<vmem>>, %arg7: memref<1x32xf32, #tpu.memory_space<vmem>>, %arg8: memref<1x16x16x32xf32, #tpu.memory_space<vmem>>) attributes {dimension_semantics = [#tpu.dimension_semantics<parallel>, #tpu.dimension_semantics<parallel>, #tpu.dimension_semantics<parallel>], iteration_bounds = array<i64: 2, 1, 1>, scalar_prefetch = 0 : i64, scratch_operands = 0 : i64, tpu.core_type = #tpu.core_type<tc>, window_params = [{transform_indices = @transform_0, window_bounds = array<i64: 1, 16, 16, 32>}, {transform_indices = @transform_1, window_bounds = array<i64: 1, 1, 16, 32>}, {transform_indices = @transform_2, window_bounds = array<i64: 1, 1, 16, 32>}, {transform_indices = @transform_3, window_bounds = array<i64: 9, 32>}, {transform_indices = @transform_4, window_bounds = array<i64: 1, 32>}, {transform_indices = @transform_5, window_bounds = array<i64: 1, 16, 16, 32>}]} {
    %c0_i32 = arith.constant 0 : i32
    %0 = arith.cmpi sgt, %arg2, %c0_i32 : i32
    %c0 = arith.constant 0 : index
    %c0_0 = arith.constant 0 : index
    %c0_1 = arith.constant 0 : index
    %c0_2 = arith.constant 0 : index
    %1 = vector.load %arg4[%c0, %c0_0, %c0_1, %c0_2] : memref<1x1x16x32xf32, #tpu.memory_space<vmem>>, vector<1x1x16x32xf32>
    %2 = vector.shape_cast %1 : vector<1x1x16x32xf32> to vector<16x32xf32>
    %cst = arith.constant 0.000000e+00 : f32
    %3 = vector.broadcast %cst : f32 to vector<16x32xf32>
    %4 = arith.select %0, %2, %3 : vector<16x32xf32>
    %c0_i32_3 = arith.constant 0 : i32
    %5 = arith.cmpi slt, %arg2, %c0_i32_3 : i32
    %c0_4 = arith.constant 0 : index
    %c0_5 = arith.constant 0 : index
    %c0_6 = arith.constant 0 : index
    %c0_7 = arith.constant 0 : index
    %6 = vector.load %arg5[%c0_4, %c0_5, %c0_6, %c0_7] : memref<1x1x16x32xf32, #tpu.memory_space<vmem>>, vector<1x1x16x32xf32>
    %7 = vector.shape_cast %6 : vector<1x1x16x32xf32> to vector<16x32xf32>
    %cst_8 = arith.constant 0.000000e+00 : f32
    %8 = vector.broadcast %cst_8 : f32 to vector<16x32xf32>
    %9 = arith.select %5, %7, %8 : vector<16x32xf32>
    %c0_9 = arith.constant 0 : index
    %c0_10 = arith.constant 0 : index
    %10 = vector.load %arg6[%c0_9, %c0_10] : memref<9x32xf32, #tpu.memory_space<vmem>>, vector<9x32xf32>
    %11 = vector.extract_strided_slice %10 {offsets = [0, 0], sizes = [1, 32], strides = [1, 1]} : vector<9x32xf32> to vector<1x32xf32>
    %12 = vector.shape_cast %11 : vector<1x32xf32> to vector<32xf32>
    %13 = vector.shape_cast %12 : vector<32xf32> to vector<1x1x32xf32>
    %14 = vector.extract_strided_slice %10 {offsets = [1, 0], sizes = [1, 32], strides = [1, 1]} : vector<9x32xf32> to vector<1x32xf32>
    %15 = vector.shape_cast %14 : vector<1x32xf32> to vector<32xf32>
    %16 = vector.shape_cast %15 : vector<32xf32> to vector<1x1x32xf32>
    %17 = vector.extract_strided_slice %10 {offsets = [2, 0], sizes = [1, 32], strides = [1, 1]} : vector<9x32xf32> to vector<1x32xf32>
    %18 = vector.shape_cast %17 : vector<1x32xf32> to vector<32xf32>
    %19 = vector.shape_cast %18 : vector<32xf32> to vector<1x1x32xf32>
    %20 = vector.extract_strided_slice %10 {offsets = [3, 0], sizes = [1, 32], strides = [1, 1]} : vector<9x32xf32> to vector<1x32xf32>
    %21 = vector.shape_cast %20 : vector<1x32xf32> to vector<32xf32>
    %22 = vector.shape_cast %21 : vector<32xf32> to vector<1x1x32xf32>
    %23 = vector.extract_strided_slice %10 {offsets = [4, 0], sizes = [1, 32], strides = [1, 1]} : vector<9x32xf32> to vector<1x32xf32>
    %24 = vector.shape_cast %23 : vector<1x32xf32> to vector<32xf32>
    %25 = vector.shape_cast %24 : vector<32xf32> to vector<1x1x32xf32>
    %26 = vector.extract_strided_slice %10 {offsets = [5, 0], sizes = [1, 32], strides = [1, 1]} : vector<9x32xf32> to vector<1x32xf32>
    %27 = vector.shape_cast %26 : vector<1x32xf32> to vector<32xf32>
    %28 = vector.shape_cast %27 : vector<32xf32> to vector<1x1x32xf32>
    %29 = vector.extract_strided_slice %10 {offsets = [6, 0], sizes = [1, 32], strides = [1, 1]} : vector<9x32xf32> to vector<1x32xf32>
    %30 = vector.shape_cast %29 : vector<1x32xf32> to vector<32xf32>
    %31 = vector.shape_cast %30 : vector<32xf32> to vector<1x1x32xf32>
    %32 = vector.extract_strided_slice %10 {offsets = [7, 0], sizes = [1, 32], strides = [1, 1]} : vector<9x32xf32> to vector<1x32xf32>
    %33 = vector.shape_cast %32 : vector<1x32xf32> to vector<32xf32>
    %34 = vector.shape_cast %33 : vector<32xf32> to vector<1x1x32xf32>
    %35 = vector.extract_strided_slice %10 {offsets = [8, 0], sizes = [1, 32], strides = [1, 1]} : vector<9x32xf32> to vector<1x32xf32>
    %36 = vector.shape_cast %35 : vector<1x32xf32> to vector<32xf32>
    %37 = vector.shape_cast %36 : vector<32xf32> to vector<1x1x32xf32>
    %c0_11 = arith.constant 0 : index
    %c0_12 = arith.constant 0 : index
    %38 = vector.load %arg7[%c0_11, %c0_12] : memref<1x32xf32, #tpu.memory_space<vmem>>, vector<1x32xf32>
    %39 = vector.shape_cast %38 : vector<1x32xf32> to vector<32xf32>
    %40 = vector.shape_cast %39 : vector<32xf32> to vector<1x1x32xf32>
    %41 = tpu.iota {dimensions = array<i32: 1>} : vector<1x16x32xi32>
    %c0_i32_13 = arith.constant 0 : i32
    %42 = vector.broadcast %c0_i32_13 : i32 to vector<1x16x32xi32>
    %43 = arith.cmpi eq, %41, %42 : vector<1x16x32xi32>
    %c15_i32 = arith.constant 15 : i32
    %44 = vector.broadcast %c15_i32 : i32 to vector<1x16x32xi32>
    %45 = arith.cmpi eq, %41, %44 : vector<1x16x32xi32>
    %46 = vector.shape_cast %4 : vector<16x32xf32> to vector<1x16x32xf32>
    %c0_14 = arith.constant 0 : index
    %c0_15 = arith.constant 0 : index
    %c0_16 = arith.constant 0 : index
    %c0_17 = arith.constant 0 : index
    %47 = vector.load %arg3[%c0_14, %c0_15, %c0_16, %c0_17] : memref<1x16x16x32xf32, #tpu.memory_space<vmem>>, vector<1x15x16x32xf32>
    %48 = vector.shape_cast %47 : vector<1x15x16x32xf32> to vector<15x16x32xf32>
    %49 = tpu.concatenate %46, %48 in 0 : vector<1x16x32xf32>, vector<15x16x32xf32> -> vector<16x16x32xf32>
    %c0_18 = arith.constant 0 : index
    %c0_19 = arith.constant 0 : index
    %c0_20 = arith.constant 0 : index
    %c0_21 = arith.constant 0 : index
    %50 = vector.load %arg3[%c0_18, %c0_19, %c0_20, %c0_21] : memref<1x16x16x32xf32, #tpu.memory_space<vmem>>, vector<1x16x16x32xf32>
    %51 = vector.shape_cast %50 : vector<1x16x16x32xf32> to vector<16x16x32xf32>
    %c0_22 = arith.constant 0 : index
    %c1 = arith.constant 1 : index
    %c0_23 = arith.constant 0 : index
    %c0_24 = arith.constant 0 : index
    %52 = vector.load %arg3[%c0_22, %c1, %c0_23, %c0_24] : memref<1x16x16x32xf32, #tpu.memory_space<vmem>>, vector<1x15x16x32xf32>
    %53 = vector.shape_cast %52 : vector<1x15x16x32xf32> to vector<15x16x32xf32>
    %54 = vector.shape_cast %9 : vector<16x32xf32> to vector<1x16x32xf32>
    %55 = tpu.concatenate %53, %54 in 0 : vector<15x16x32xf32>, vector<1x16x32xf32> -> vector<16x16x32xf32>
    %56 = vector.broadcast %16 : vector<1x1x32xf32> to vector<16x16x32xf32>
    %57 = arith.mulf %49, %56 : vector<16x16x32xf32>
    %58 = vector.broadcast %25 : vector<1x1x32xf32> to vector<16x16x32xf32>
    %59 = arith.mulf %51, %58 : vector<16x16x32xf32>
    %60 = arith.addf %57, %59 : vector<16x16x32xf32>
    %61 = vector.broadcast %34 : vector<1x1x32xf32> to vector<16x16x32xf32>
    %62 = arith.mulf %55, %61 : vector<16x16x32xf32>
    %63 = arith.addf %60, %62 : vector<16x16x32xf32>
    %64 = vector.broadcast %13 : vector<1x1x32xf32> to vector<16x16x32xf32>
    %65 = arith.mulf %49, %64 : vector<16x16x32xf32>
    %66 = vector.broadcast %22 : vector<1x1x32xf32> to vector<16x16x32xf32>
    %67 = arith.mulf %51, %66 : vector<16x16x32xf32>
    %68 = arith.addf %65, %67 : vector<16x16x32xf32>
    %69 = vector.broadcast %31 : vector<1x1x32xf32> to vector<16x16x32xf32>
    %70 = arith.mulf %55, %69 : vector<16x16x32xf32>
    %71 = arith.addf %68, %70 : vector<16x16x32xf32>
    %72 = vector.broadcast %19 : vector<1x1x32xf32> to vector<16x16x32xf32>
    %73 = arith.mulf %49, %72 : vector<16x16x32xf32>
    %74 = vector.broadcast %28 : vector<1x1x32xf32> to vector<16x16x32xf32>
    %75 = arith.mulf %51, %74 : vector<16x16x32xf32>
    %76 = arith.addf %73, %75 : vector<16x16x32xf32>
    %77 = vector.broadcast %37 : vector<1x1x32xf32> to vector<16x16x32xf32>
    %78 = arith.mulf %55, %77 : vector<16x16x32xf32>
    %79 = arith.addf %76, %78 : vector<16x16x32xf32>
    %c1_i32 = arith.constant 1 : i32
    %80 = tpu.dynamic_rotate %71 by %c1_i32 dim 1 : vector<16x16x32xf32>, i32 -> vector<16x16x32xf32>
    %cst_25 = arith.constant 0.000000e+00 : f32
    %81 = vector.shape_cast %43 : vector<1x16x32xi1> to vector<1x16x32xi1>
    %82 = vector.broadcast %81 : vector<1x16x32xi1> to vector<16x16x32xi1>
    %83 = vector.broadcast %cst_25 : f32 to vector<16x16x32xf32>
    %84 = arith.select %82, %83, %80 : vector<16x16x32xi1>, vector<16x16x32xf32>
    %85 = arith.addf %63, %84 : vector<16x16x32xf32>
    %c15_i32_26 = arith.constant 15 : i32
    %86 = tpu.dynamic_rotate %79 by %c15_i32_26 dim 1 : vector<16x16x32xf32>, i32 -> vector<16x16x32xf32>
    %cst_27 = arith.constant 0.000000e+00 : f32
    %87 = vector.shape_cast %45 : vector<1x16x32xi1> to vector<1x16x32xi1>
    %88 = vector.broadcast %87 : vector<1x16x32xi1> to vector<16x16x32xi1>
    %89 = vector.broadcast %cst_27 : f32 to vector<16x16x32xf32>
    %90 = arith.select %88, %89, %86 : vector<16x16x32xi1>, vector<16x16x32xf32>
    %91 = arith.addf %85, %90 : vector<16x16x32xf32>
    %92 = vector.broadcast %40 : vector<1x1x32xf32> to vector<16x16x32xf32>
    %93 = arith.addf %91, %92 : vector<16x16x32xf32>
    %c0_28 = arith.constant 0 : index
    %c0_29 = arith.constant 0 : index
    %c0_30 = arith.constant 0 : index
    %c0_31 = arith.constant 0 : index
    %94 = vector.load %arg8[%c0_28, %c0_29, %c0_30, %c0_31] : memref<1x16x16x32xf32, #tpu.memory_space<vmem>>, vector<1x16x16x32xf32>
    %95 = vector.shape_cast %94 : vector<1x16x16x32xf32> to vector<16x16x32xf32>
    %96 = vector.shape_cast %93 : vector<16x16x32xf32> to vector<1x16x16x32xf32>
    tpu.vector_store %arg8[%c0_28, %c0_29, %c0_30, %c0_31], %96 {strides = array<i32>} : memref<1x16x16x32xf32, #tpu.memory_space<vmem>>, vector<1x16x16x32xf32>,
    return
  }
  func.func @transform_0(%arg0: i32, %arg1: i32, %arg2: i32) -> (i32, i32, i32, i32) {
    %c0_i32 = arith.constant 0 : i32
    %c0_i32_0 = arith.constant 0 : i32
    return %arg0, %arg2, %c0_i32, %arg1 : i32, i32, i32, i32
  }
  func.func @transform_1(%arg0: i32, %arg1: i32, %arg2: i32) -> (i32, i32, i32, i32) {
    %c16_i32 = arith.constant 16 : i32
    %0 = arith.muli %arg2, %c16_i32 : i32
    %c1_i32 = arith.constant 1 : i32
    %1 = arith.subi %0, %c1_i32 : i32
    %c0_i32 = arith.constant 0 : i32
    %2 = arith.maxsi %1, %c0_i32 : i32
    %c0_i32_0 = arith.constant 0 : i32
    %c0_i32_1 = arith.constant 0 : i32
    return %arg0, %2, %c0_i32_0, %arg1 : i32, i32, i32, i32
  }
  func.func @transform_2(%arg0: i32, %arg1: i32, %arg2: i32) -> (i32, i32, i32, i32) {
    %c16_i32 = arith.constant 16 : i32
    %0 = arith.muli %arg2, %c16_i32 : i32
    %c16_i32_0 = arith.constant 16 : i32
    %1 = arith.addi %0, %c16_i32_0 : i32
    %c15_i32 = arith.constant 15 : i32
    %2 = arith.minsi %1, %c15_i32 : i32
    %c0_i32 = arith.constant 0 : i32
    %c0_i32_1 = arith.constant 0 : i32
    return %arg0, %2, %c0_i32, %arg1 : i32, i32, i32, i32
  }
  func.func @transform_3(%arg0: i32, %arg1: i32, %arg2: i32) -> (i32, i32) {
    %c0_i32 = arith.constant 0 : i32
    %c0_i32_0 = arith.constant 0 : i32
    return %c0_i32, %arg1 : i32, i32
  }
  func.func @transform_4(%arg0: i32, %arg1: i32, %arg2: i32) -> (i32, i32) {
    %c0_i32 = arith.constant 0 : i32
    %c0_i32_0 = arith.constant 0 : i32
    return %c0_i32, %arg1 : i32, i32
  }
  func.func @transform_5(%arg0: i32, %arg1: i32, %arg2: i32) -> (i32, i32, i32, i32) {
    %c0_i32 = arith.constant 0 : i32
    %c0_i32_0 = arith.constant 0 : i32
    return %arg0, %arg2, %c0_i32, %arg1 : i32, i32, i32, i32
  }
}

</mosaic_0001>

<llo_original>
// kernel: tpu_custom_call.1
$region0: #{tpu_custom_call.1}
  #allocation0 [shape = 'u32[]', space=smem, size = 0x4, offset = 0x4, fixed_abs, tag = 'smem constant byte address 0x4 - core index']
  #allocation1 [shape = 'u32[144,128]{1,0:T(1,128)}', space=vmem, size = 0x12000, scoped, tag = 'internal scratch']
  %s0 = inlined_call_operand.hbm [shape: f32[2,16,16,32], index: 0, kind: input, shape index: {}]
  %s1 = inlined_call_operand.hbm [shape: f32[2,16,16,32], index: 1, kind: input, shape index: {}]
  %s2 = inlined_call_operand.hbm [shape: f32[2,16,16,32], index: 2, kind: input, shape index: {}]
  %s3 = inlined_call_operand.hbm [shape: f32[9,32], index: 3, kind: input, shape index: {}]
  %s4 = inlined_call_operand.vmem [shape: f32[1,32], index: 4, kind: input, shape index: {}]
  %s5 = inlined_call_operand.hbm [shape: f32[2,16,16,32], index: 5, kind: output, shape index: {}]
  %s6 = sld [smem:[#allocation0]]
  $region69: #{tpu_custom_call.1} parent=0
    _
  %s8 = ssub.s32 1, %s6
  %s9 = scalar_select 0, %s8, %s6
  $region1: #{tpu_custom_call.1} parent=0
    #allocation2 [shape = 'u8[262144]{0}', space=vmem, size = 0x40000, scoped, tag = 'input window, operand 0']
    #allocation3 [shape = 's32[2]{0}', space=sflag, size = 0x8, scoped, tag = 'scoped memory for tpu_custom_call.1']
    #allocation4 [shape = 's32[2]{0}', space=sflag, size = 0x8, scoped, tag = 'scoped memory for tpu_custom_call.1']
    #allocation5 [shape = 'u8[16384]{0}', space=vmem, size = 0x4000, scoped, tag = 'input window, operand 1']
    #allocation6 [shape = 's32[2]{0}', space=sflag, size = 0x8, scoped, tag = 'scoped memory for tpu_custom_call.1']
    #allocation7 [shape = 'u8[16384]{0}', space=vmem, size = 0x4000, scoped, tag = 'input window, operand 2']
    #allocation8 [shape = 'u8[8192]{0}', space=vmem, size = 0x2000, scoped, tag = 'input window, operand 3, single buffered']
    #allocation9 [shape = 's32[1]{0}', space=sflag, size = 0x4, scoped, tag = 'scoped memory for tpu_custom_call.1']
    #allocation10 [shape = 'u8[262144]{0}', space=vmem, size = 0x40000, scoped, tag = 'output window, operand 0']
    %10 = vsyncpa [#allocation3], 0
    %s11 = scalar_lea.sflag [#allocation3], 1
    %12 = vsyncpa %s11, 0
    %13 = vsyncpa [#allocation6], 0
    %s14 = scalar_lea.sflag [#allocation6], 1
    %15 = vsyncpa %s14, 0
    %16 = vsyncpa [#allocation9], 0
    %17 = vsyncpa [#allocation4], 0
    %s18 = scalar_lea.sflag [#allocation4], 1
    %19 = vsyncpa %s18, 0
    loop: start=0, step=1, limit=4
    $region2: #{tpu_custom_call.1} parent=1 // loop_pre_header
      _
    $region3: #{tpu_custom_call.1} parent=1 // loop_header
      %s21 = sphi 0, %s25
      %p22 = scmp.ge.s32.totalorder %s21, 4
      %s28 = sphi 0, %s47
      %s29 = sphi 0, %s43
      %s30 = sphi 0, %s39
      %s31 = sphi 0, %s28
      %s32 = sphi 0, %s29
      %s33 = sphi 0, %s30
      %s34 = sphi 0, %s31
      %s35 = sphi 0, %s32
      %s36 = sphi 0, %s33
      %s54 = sphi 0, %s56
      %s57 = sphi 0, %s54
      %s58 = sphi 0, %s57
      %s74 = sphi 0, %s58
      %s92 = sphi 0, %s94
      %s95 = sphi 0, %s92
      %s96 = sphi 0, %s95
      %s112 = sphi 0, %s96
      %s130 = sphi 0, %s132
      %s133 = sphi 0, %s130
      %s134 = sphi 0, %s133
      %s150 = sphi 0, %s134
      %s156 = sphi 0, %s158
      %s159 = sphi 0, %s156
      %s160 = sphi 0, %s159
      %s176 = sphi 0, %s160
      %s182 = sphi 0, %s184
      %s185 = sphi 0, %s182
      %s186 = sphi 0, %s185
      %s202 = sphi 0, %s186
      %s212 = sphi 0, %s214
      %s215 = sphi 0, %s212
      %s216 = sphi 0, %s215
      %s232 = sphi 0, %s216
    $region4: #{tpu_custom_call.1} parent=1 // loop_header_branch
      %24 = sbr.rel (%p22) target = $region8
    $region5: #{tpu_custom_call.1} parent=1 // loop_body
      %s26 = ssub.s32 %s21, 1
      %s27 = ssub.s32 %s21, 2
      %s37 = sadd.s32 1, %s30
      %p38 = scmp.ge.s32.totalorder %s37, 1
      %s39 = scalar_select %p38, 0, %s37
      %s40 = sadd.s32 1, %s29
      %s41 = scalar_select %p38, %s40, %s29
      %p42 = scmp.ge.s32.totalorder %s41, 1
      %s43 = scalar_select %p42, 0, %s41
      %s44 = sadd.s32 1, %s28
      %s45 = scalar_select %p42, %s44, %s28
      %p46 = scmp.ge.s32.totalorder %s45, 2
      %s47 = scalar_select %p46, 0, %s45
      %s48 = ssub.s32 %s28, %s47
      %s49 = ssub.s32 %s30, %s39
      %s50 = sor.u32 %s48, %s49
      %s51 = ssub.s32 %s29, %s43
      %s52 = sor.u32 %s50, %s51
      %p53 = scmp.eq.s32.totalorder %s52, 0
      %s55 = sadd.s32 %s54, 1
      %s56 = scalar_select %p53, %s54, %s55
      %p59 = pneg %p53
      %p60 = scmp.eq.s32.totalorder %s21, 1
      %p61 = por %p59, %p60
      %p62 = scmp.ne.s32.totalorder %s54, %s57
      %p63 = scmp.eq.s32.totalorder %s21, 0
      %p64 = por %p62, %p63
      %p65 = scmp.ne.s32.totalorder %s54, %s57
      %p66 = scmp.eq.s32.totalorder %s26, 1
      %p67 = por %p65, %p66
      %p68 = scmp.ne.s32.totalorder %s57, %s58
      %p69 = scmp.eq.s32.totalorder %s26, 0
      %p70 = por %p68, %p69
      %p71 = scmp.ne.s32.totalorder %s57, %s58
      %p72 = scmp.eq.s32.totalorder %s27, 1
      %p73 = por %p71, %p72
      %p75 = scmp.ne.s32.totalorder %s58, %s74
      %p76 = scmp.eq.s32.totalorder %s27, 0
      %p77 = por %p75, %p76
      %s78 = smul.u32 %s30, 16
      %s79 = ssub.s32 %s78, 1
      %p80 = scmp.gt.s32.totalorder %s79, 0
      %s81 = scalar_select %p80, %s79, 0
      %s82 = smul.u32 %s39, 16
      %s83 = ssub.s32 %s82, 1
      %p84 = scmp.gt.s32.totalorder %s83, 0
      %s85 = scalar_select %p84, %s83, 0
      %s86 = ssub.s32 %s28, %s47
      %s87 = ssub.s32 %s81, %s85
      %s88 = sor.u32 %s86, %s87
      %s89 = ssub.s32 %s29, %s43
      %s90 = sor.u32 %s88, %s89
      %p91 = scmp.eq.s32.totalorder %s90, 0
      %s93 = sadd.s32 %s92, 1
      %s94 = scalar_select %p91, %s92, %s93
      %p97 = pneg %p91
      %p98 = scmp.eq.s32.totalorder %s21, 1
      %p99 = por %p97, %p98
      %p100 = scmp.ne.s32.totalorder %s92, %s95
      %p101 = scmp.eq.s32.totalorder %s21, 0
      %p102 = por %p100, %p101
      %p103 = scmp.ne.s32.totalorder %s92, %s95
      %p104 = scmp.eq.s32.totalorder %s26, 1
      %p105 = por %p103, %p104
      %p106 = scmp.ne.s32.totalorder %s95, %s96
      %p107 = scmp.eq.s32.totalorder %s26, 0
      %p108 = por %p106, %p107
      %p109 = scmp.ne.s32.totalorder %s95, %s96
      %p110 = scmp.eq.s32.totalorder %s27, 1
      %p111 = por %p109, %p110
      %p113 = scmp.ne.s32.totalorder %s96, %s112
      %p114 = scmp.eq.s32.totalorder %s27, 0
      %p115 = por %p113, %p114
      %s116 = smul.u32 %s30, 16
      %s117 = sadd.s32 %s116, 16
      %p118 = scmp.lt.s32.totalorder %s117, 15
      %s119 = scalar_select %p118, %s117, 15
      %s120 = smul.u32 %s39, 16
      %s121 = sadd.s32 %s120, 16
      %p122 = scmp.lt.s32.totalorder %s121, 15
      %s123 = scalar_select %p122, %s121, 15
      %s124 = ssub.s32 %s28, %s47
      %s125 = ssub.s32 %s119, %s123
      %s126 = sor.u32 %s124, %s125
      %s127 = ssub.s32 %s29, %s43
      %s128 = sor.u32 %s126, %s127
      %p129 = scmp.eq.s32.totalorder %s128, 0
      %s131 = sadd.s32 %s130, 1
      %s132 = scalar_select %p129, %s130, %s131
      %p135 = pneg %p129
      %p136 = scmp.eq.s32.totalorder %s21, 1
      %p137 = por %p135, %p136
      %p138 = scmp.ne.s32.totalorder %s130, %s133
      %p139 = scmp.eq.s32.totalorder %s21, 0
      %p140 = por %p138, %p139
      %p141 = scmp.ne.s32.totalorder %s130, %s133
      %p142 = scmp.eq.s32.totalorder %s26, 1
      %p143 = por %p141, %p142
      %p144 = scmp.ne.s32.totalorder %s133, %s134
      %p145 = scmp.eq.s32.totalorder %s26, 0
      %p146 = por %p144, %p145
      %p147 = scmp.ne.s32.totalorder %s133, %s134
      %p148 = scmp.eq.s32.totalorder %s27, 1
      %p149 = por %p147, %p148
      %p151 = scmp.ne.s32.totalorder %s134, %s150
      %p152 = scmp.eq.s32.totalorder %s27, 0
      %p153 = por %p151, %p152
      %s154 = ssub.s32 %s29, %s43
      %p155 = scmp.eq.s32.totalorder %s154, 0
      %s157 = sadd.s32 %s156, 1
      %s158 = scalar_select %p155, %s156, %s157
      %p161 = pneg %p155
      %p162 = scmp.eq.s32.totalorder %s21, 1
      %p163 = por %p161, %p162
      %p164 = scmp.ne.s32.totalorder %s156, %s159
      %p165 = scmp.eq.s32.totalorder %s21, 0
      %p166 = por %p164, %p165
      %p167 = scmp.ne.s32.totalorder %s156, %s159
      %p168 = scmp.eq.s32.totalorder %s26, 1
      %p169 = por %p167, %p168
      %p170 = scmp.ne.s32.totalorder %s159, %s160
      %p171 = scmp.eq.s32.totalorder %s26, 0
      %p172 = por %p170, %p171
      %p173 = scmp.ne.s32.totalorder %s159, %s160
      %p174 = scmp.eq.s32.totalorder %s27, 1
      %p175 = por %p173, %p174
      %p177 = scmp.ne.s32.totalorder %s160, %s176
      %p178 = scmp.eq.s32.totalorder %s27, 0
      %p179 = por %p177, %p178
      %s180 = ssub.s32 %s29, %s43
      %p181 = scmp.eq.s32.totalorder %s180, 0
      %s183 = sadd.s32 %s182, 1
      %s184 = scalar_select %p181, %s182, %s183
      %p187 = pneg %p181
      %p188 = scmp.eq.s32.totalorder %s21, 1
      %p189 = por %p187, %p188
      %p190 = scmp.ne.s32.totalorder %s182, %s185
      %p191 = scmp.eq.s32.totalorder %s21, 0
      %p192 = por %p190, %p191
      %p193 = scmp.ne.s32.totalorder %s182, %s185
      %p194 = scmp.eq.s32.totalorder %s26, 1
      %p195 = por %p193, %p194
      %p196 = scmp.ne.s32.totalorder %s185, %s186
      %p197 = scmp.eq.s32.totalorder %s26, 0
      %p198 = por %p196, %p197
      %p199 = scmp.ne.s32.totalorder %s185, %s186
      %p200 = scmp.eq.s32.totalorder %s27, 1
      %p201 = por %p199, %p200
      %p203 = scmp.ne.s32.totalorder %s186, %s202
      %p204 = scmp.eq.s32.totalorder %s27, 0
      %p205 = por %p203, %p204
      %s206 = ssub.s32 %s28, %s47
      %s207 = ssub.s32 %s30, %s39
      %s208 = sor.u32 %s206, %s207
      %s209 = ssub.s32 %s29, %s43
      %s210 = sor.u32 %s208, %s209
      %p211 = scmp.eq.s32.totalorder %s210, 0
      %s213 = sadd.s32 %s212, 1
      %s214 = scalar_select %p211, %s212, %s213
      %p217 = pneg %p211
      %p218 = scmp.eq.s32.totalorder %s21, 1
      %p219 = por %p217, %p218
      %p220 = scmp.ne.s32.totalorder %s212, %s215
      %p221 = scmp.eq.s32.totalorder %s21, 0
      %p222 = por %p220, %p221
      %p223 = scmp.ne.s32.totalorder %s212, %s215
      %p224 = scmp.eq.s32.totalorder %s26, 1
      %p225 = por %p223, %p224
      %p226 = scmp.ne.s32.totalorder %s215, %s216
      %p227 = scmp.eq.s32.totalorder %s26, 0
      %p228 = por %p226, %p227
      %p229 = scmp.ne.s32.totalorder %s215, %s216
      %p230 = scmp.eq.s32.totalorder %s27, 1
      %p231 = por %p229, %p230
      %p233 = scmp.ne.s32.totalorder %s216, %s232
      %p234 = scmp.eq.s32.totalorder %s27, 0
      %p235 = por %p233, %p234
      %p236 = scmp.le.s32.totalorder 1, %s21
      %p237 = scmp.lt.s32.totalorder %s21, 3
      %p238 = pnand %p236, %p237
      %p239 = pneg %p238
      // Predicated region
      $region9: #{tpu_custom_call.1} parent=5 // pred_check
        _
      $region10: #{tpu_custom_call.1} parent=5 // pred_check_branch
        %241 = sbr.rel (%p238) target = $region12
      $region11: #{tpu_custom_call.1} parent=5 // pred_region
        %s242 = ssub.s32 %s21, 1
        // Predicated region
        $region13: #{tpu_custom_call.1} parent=11 // pred_check
          %p243 = pneg %p172
        $region14: #{tpu_custom_call.1} parent=11 // pred_check_branch
          %245 = sbr.rel (%p243) target = $region16
        $region15: #{tpu_custom_call.1} parent=11 // pred_region
          %s247 = ssub.s32 256, 256
          %248 = vsyncadd [#allocation9], %s247
          %s249 = smul.addr %s32, 128
          %s250 = scalar_lea.hbm %s3, %s249
          %s251 = sshll.u32 [#allocation8], 4
          %s252 = int_to_ptr.vmem [resolvable:$true] %s251
          %257 = dma.hbm_to_vmem [thread:$0]  %s250, 256, %s252, [#allocation9], 128, 128, 8
        $region16: #{tpu_custom_call.1} parent=11 // pred_fallthru
          _
        // Predicated region
        $region17: #{tpu_custom_call.1} parent=11 // pred_check
          %p258 = pneg %p198
        $region18: #{tpu_custom_call.1} parent=11 // pred_check_branch
          %260 = sbr.rel (%p258) target = $region20
        $region19: #{tpu_custom_call.1} parent=11 // pred_region
          %p261 = scmp.lt.s32.totalorder %s32, 0
          %s262 = scalar_select %p261, %s32, 0
          %s263 = scalar_lea.vmem %s4, %s262
        $region20: #{tpu_custom_call.1} parent=11 // pred_fallthru
          _
      $region12: #{tpu_custom_call.1} parent=5 // pred_fallthru
        _
      %p264 = scmp.lt.s32.totalorder %s21, 2
      // Predicated region
      $region21: #{tpu_custom_call.1} parent=5 // pred_check
        %p265 = pneg %p264
      $region22: #{tpu_custom_call.1} parent=5 // pred_check_branch
        %267 = sbr.rel (%p265) target = $region24
      $region23: #{tpu_custom_call.1} parent=5 // pred_region
        // Predicated region
        $region25: #{tpu_custom_call.1} parent=23 // pred_check
          %p268 = pneg %p64
        $region26: #{tpu_custom_call.1} parent=23 // pred_check_branch
          %270 = sbr.rel (%p268) target = $region28
        $region27: #{tpu_custom_call.1} parent=23 // pred_region
          %s271 = sand.u32 %s54, 1
          %s272 = scalar_lea.sflag [#allocation3], %s271
          %s273 = sand.u32 %s54, 1
          %s274 = smul.addr %s273, 256
          %s275 = scalar_lea.vmem [#allocation2], %s274
          %s276 = smul.u32 16, %s30
          %s278 = ssub.s32 4096, 4096
          %279 = vsyncadd %s272, %s278
          %s280 = smul.addr %s276, 2
          %s281 = sadd.s32 %s29, %s280
          %s282 = smul.addr %s28, 32
          %s283 = sadd.s32 %s281, %s282
          %s284 = smul.addr %s283, 128
          %s285 = scalar_lea.hbm %s0, %s284
          %s286 = sshll.u32 %s275, 4
          %s287 = int_to_ptr.vmem [resolvable:$true] %s286
          %292 = dma.hbm_to_vmem [thread:$0]  %s285, 4096, %s287, %s272, 128, 128, 8
        $region28: #{tpu_custom_call.1} parent=23 // pred_fallthru
          _
        // Predicated region
        $region29: #{tpu_custom_call.1} parent=23 // pred_check
          %p293 = pneg %p102
        $region30: #{tpu_custom_call.1} parent=23 // pred_check_branch
          %295 = sbr.rel (%p293) target = $region32
        $region31: #{tpu_custom_call.1} parent=23 // pred_region
          %s296 = sand.u32 %s21, 1
          %s297 = scalar_lea.sflag [#allocation6], %s296
          %s298 = sand.u32 %s92, 1
          %s299 = smul.addr %s298, 16
          %s300 = scalar_lea.vmem [#allocation5], %s299
          %s301 = smul.u32 %s30, 16
          %s302 = ssub.s32 %s301, 1
          %p303 = scmp.gt.s32.totalorder %s302, 0
          %s304 = scalar_select %p303, %s302, 0
          %s306 = ssub.s32 256, 256
          %307 = vsyncadd %s297, %s306
          %s308 = smul.addr %s304, 2
          %s309 = sadd.s32 %s29, %s308
          %s310 = smul.addr %s28, 32
          %s311 = sadd.s32 %s309, %s310
          %s312 = smul.addr %s311, 128
          %s313 = scalar_lea.hbm %s1, %s312
          %s314 = sshll.u32 %s300, 4
          %s315 = int_to_ptr.vmem [resolvable:$true] %s314
          %320 = dma.hbm_to_vmem [thread:$0]  %s313, 256, %s315, %s297, 128, 128, 8
        $region32: #{tpu_custom_call.1} parent=23 // pred_fallthru
          _
        // Predicated region
        $region33: #{tpu_custom_call.1} parent=23 // pred_check
          %p321 = pneg %p140
        $region34: #{tpu_custom_call.1} parent=23 // pred_check_branch
          %323 = sbr.rel (%p321) target = $region36
        $region35: #{tpu_custom_call.1} parent=23 // pred_region
          %s324 = sand.u32 %s21, 1
          %s325 = scalar_lea.sflag [#allocation6], %s324
          %s326 = sand.u32 %s130, 1
          %s327 = smul.addr %s326, 16
          %s328 = scalar_lea.vmem [#allocation7], %s327
          %s329 = smul.u32 %s30, 16
          %s330 = sadd.s32 %s329, 16
          %p331 = scmp.lt.s32.totalorder %s330, 15
          %s332 = scalar_select %p331, %s330, 15
          %s334 = ssub.s32 256, 256
          %335 = vsyncadd %s325, %s334
          %s336 = smul.addr %s332, 2
          %s337 = sadd.s32 %s29, %s336
          %s338 = smul.addr %s28, 32
          %s339 = sadd.s32 %s337, %s338
          %s340 = smul.addr %s339, 128
          %s341 = scalar_lea.hbm %s2, %s340
          %s342 = sshll.u32 %s328, 4
          %s343 = int_to_ptr.vmem [resolvable:$true] %s342
          %348 = dma.hbm_to_vmem [thread:$0]  %s341, 256, %s343, %s325, 128, 128, 8
        $region36: #{tpu_custom_call.1} parent=23 // pred_fallthru
          _
      $region24: #{tpu_custom_call.1} parent=5 // pred_fallthru
        _
      %p349 = scmp.le.s32.totalorder 1, %s21
      %p350 = scmp.lt.s32.totalorder %s21, 3
      %p351 = pnand %p349, %p350
      %p352 = pneg %p351
      // Predicated region
      $region37: #{tpu_custom_call.1} parent=5 // pred_check
        _
      $region38: #{tpu_custom_call.1} parent=5 // pred_check_branch
        %354 = sbr.rel (%p351) target = $region40
      $region39: #{tpu_custom_call.1} parent=5 // pred_region
        %s355 = ssub.s32 %s21, 1
        %s356 = sand.u32 %s57, 1
        %s357 = scalar_lea.sflag [#allocation3], %s356
        %s358 = sand.u32 %s57, 1
        %s359 = smul.addr %s358, 256
        %s360 = scalar_lea.vmem [#allocation2], %s359
        // Predicated region
        $region41: #{tpu_custom_call.1} parent=39 // pred_check
          %p361 = pneg %p70
        $region42: #{tpu_custom_call.1} parent=39 // pred_check_branch
          %363 = sbr.rel (%p361) target = $region44
        $region43: #{tpu_custom_call.1} parent=39 // pred_region
          %364 = dma.done %s357, 4096
        $region44: #{tpu_custom_call.1} parent=39 // pred_fallthru
          _
        %s365 = sand.u32 %s26, 1
        %s366 = scalar_lea.sflag [#allocation6], %s365
        %s367 = sand.u32 %s95, 1
        %s368 = smul.addr %s367, 16
        %s369 = scalar_lea.vmem [#allocation5], %s368
        // Predicated region
        $region45: #{tpu_custom_call.1} parent=39 // pred_check
          %p370 = pneg %p108
        $region46: #{tpu_custom_call.1} parent=39 // pred_check_branch
          %372 = sbr.rel (%p370) target = $region48
        $region47: #{tpu_custom_call.1} parent=39 // pred_region
          %373 = dma.done %s366, 256
        $region48: #{tpu_custom_call.1} parent=39 // pred_fallthru
          _
        %s374 = sand.u32 %s26, 1
        %s375 = scalar_lea.sflag [#allocation6], %s374
        %s376 = sand.u32 %s133, 1
        %s377 = smul.addr %s376, 16
        %s378 = scalar_lea.vmem [#allocation7], %s377
        // Predicated region
        $region49: #{tpu_custom_call.1} parent=39 // pred_check
          %p379 = pneg %p146
        $region50: #{tpu_custom_call.1} parent=39 // pred_check_branch
          %381 = sbr.rel (%p379) target = $region52
        $region51: #{tpu_custom_call.1} parent=39 // pred_region
          %382 = dma.done %s375, 256
        $region52: #{tpu_custom_call.1} parent=39 // pred_fallthru
          _
        // Predicated region
        $region53: #{tpu_custom_call.1} parent=39 // pred_check
          %p383 = pneg %p172
        $region54: #{tpu_custom_call.1} parent=39 // pred_check_branch
          %385 = sbr.rel (%p383) target = $region56
        $region55: #{tpu_custom_call.1} parent=39 // pred_region
          %386 = dma.done [#allocation9], 256
        $region56: #{tpu_custom_call.1} parent=39 // pred_fallthru
          _
        %s387 = sand.u32 %s57, 1
        %s388 = scalar_lea.sflag [#allocation3], %s387
        %s389 = sand.u32 %s57, 1
        %s390 = smul.addr %s389, 256
        %s391 = scalar_lea.vmem [#allocation2], %s390
        %p392 = pneg %p70
        %p393 = pneg %p67
        %s394 = sand.u32 %s26, 1
        %s395 = scalar_lea.sflag [#allocation6], %s394
        %s396 = sand.u32 %s95, 1
        %s397 = smul.addr %s396, 16
        %s398 = scalar_lea.vmem [#allocation5], %s397
        %p399 = pneg %p108
        %p400 = pneg %p105
        %s401 = sand.u32 %s26, 1
        %s402 = scalar_lea.sflag [#allocation6], %s401
        %s403 = sand.u32 %s133, 1
        %s404 = smul.addr %s403, 16
        %s405 = scalar_lea.vmem [#allocation7], %s404
        %p406 = pneg %p146
        %p407 = pneg %p143
        %p408 = pneg %p172
        %p409 = pneg %p169
        %p410 = scmp.lt.s32.totalorder %s32, 0
        %s411 = scalar_select %p410, %s32, 0
        %s412 = scalar_lea.vmem %s4, %s411
        %p413 = pneg %p198
        %p414 = pneg %p195
        %p415 = pneg %p228
        %p416 = pneg %p225
        %s417 = sand.u32 %s215, 1
        %s418 = scalar_lea.sflag [#allocation4], %s417
        %s419 = sand.u32 %s215, 1
        %s420 = smul.addr %s419, 256
        %s421 = scalar_lea.vmem [#allocation10], %s420
        %s422 = smul.u32 16, %s33
        %s423 = smul.u32 %s33, 16
        %s424 = ssub.s32 %s423, 1
        %p425 = scmp.gt.s32.totalorder %s424, 0
        %s426 = scalar_select %p425, %s424, 0
        %s427 = smul.u32 %s33, 16
        %s428 = sadd.s32 %s427, 16
        %p429 = scmp.lt.s32.totalorder %s428, 15
        %s430 = scalar_select %p429, %s428, 15
        %p431 = scmp.lt.s32.totalorder %s32, 0
        %s432 = scalar_select %p431, %s32, 0
        %s433 = scalar_lea.vmem %s4, %s432
        %s434 = smul.u32 16, %s33
        %p435 = scmp.gt.s32.totalorder %s33, 0
        %v436 = vld [vmem:[%s369] sm:$0xff]
        %v437 = vld [vmem:[%s369 + $0x8] sm:$0xff]
        %s438 = scalar_select %p435, 1, 0
        %v439 = vstv %s438
        %vm440 = vcmp.eq.s32.totalorder %v439, 1
        %v441 = vsel %vm440, %v436, 0.0
        %v442 = vsel %vm440, %v437, 0.0
        %p443 = scmp.lt.s32.totalorder %s33, 0
        %v444 = vld [vmem:[%s378] sm:$0xff]
        %v445 = vld [vmem:[%s378 + $0x8] sm:$0xff]
        %s446 = scalar_select %p443, 1, 0
        %v447 = vstv %s446
        %vm448 = vcmp.eq.s32.totalorder %v447, 1
        %v449 = vsel %vm448, %v444, 0.0
        %v450 = vsel %vm448, %v445, 0.0
        %v451 = vld [vmem:[#allocation8] sm:$0xff]
        %v452 = vld [vmem:[#allocation8 + $0x8] sm:$0x1]
        %v453 = vld [vmem:[%s433] sm:$0x1]
        %v454 = vlaneseq
        %v455 = vshrl.u32 %v454, 7
        %v456 = vadd.s32 %v455, 8
        %vm457 = vcmp.eq.s32.totalorder %v455, 0
        %vm458 = vcmp.eq.s32.totalorder %v456, 0
        %vm459 = vcmp.eq.s32.totalorder %v455, 15
        %vm460 = vcmp.eq.s32.totalorder %v456, 15
        %v461 = vld [vmem:[%s360] sm:$0xff]
        %v462 = vld [vmem:[%s360 + $0x8] sm:$0xff]
        %v463 = vld [vmem:[%s360 + $0x10] sm:$0xff]
        %v464 = vld [vmem:[%s360 + $0x18] sm:$0xff]
        %v465 = vld [vmem:[%s360 + $0x20] sm:$0xff]
        %v466 = vld [vmem:[%s360 + $0x28] sm:$0xff]
        %v467 = vld [vmem:[%s360 + $0x30] sm:$0xff]
        %v468 = vld [vmem:[%s360 + $0x38] sm:$0xff]
        %v469 = vld [vmem:[%s360 + $0x40] sm:$0xff]
        %v470 = vld [vmem:[%s360 + $0x48] sm:$0xff]
        %v471 = vld [vmem:[%s360 + $0x50] sm:$0xff]
        %v472 = vld [vmem:[%s360 + $0x58] sm:$0xff]
        %v473 = vld [vmem:[%s360 + $0x60] sm:$0xff]
        %v474 = vld [vmem:[%s360 + $0x68] sm:$0xff]
        %v475 = vld [vmem:[%s360 + $0x70] sm:$0xff]
        %v476 = vld [vmem:[%s360 + $0x78] sm:$0xff]
        %v477 = vld [vmem:[%s360 + $0x80] sm:$0xff]
        %v478 = vld [vmem:[%s360 + $0x88] sm:$0xff]
        %v479 = vld [vmem:[%s360 + $0x90] sm:$0xff]
        %v480 = vld [vmem:[%s360 + $0x98] sm:$0xff]
        %v481 = vld [vmem:[%s360 + $0xa0] sm:$0xff]
        %v482 = vld [vmem:[%s360 + $0xa8] sm:$0xff]
        %v483 = vld [vmem:[%s360 + $0xb0] sm:$0xff]
        %v484 = vld [vmem:[%s360 + $0xb8] sm:$0xff]
        %v485 = vld [vmem:[%s360 + $0xc0] sm:$0xff]
        %v486 = vld [vmem:[%s360 + $0xc8] sm:$0xff]
        %v487 = vld [vmem:[%s360 + $0xd0] sm:$0xff]
        %v488 = vld [vmem:[%s360 + $0xd8] sm:$0xff]
        %v489 = vld [vmem:[%s360 + $0xe0] sm:$0xff]
        %v490 = vld [vmem:[%s360 + $0xe8] sm:$0xff]
        %v491 = vld [vmem:[%s360 + $0xf0] sm:$0xff]
        %v492 = vld [vmem:[%s360 + $0xf8] sm:$0xff]
        %s493 = scalar_lea.vmem %s360, 16 [#allocation2]
        %v494 = vld [vmem:[%s493] sm:$0xff]
        %v495 = vld [vmem:[%s493 + $0x8] sm:$0xff]
        %v496 = vld [vmem:[%s493 + $0x10] sm:$0xff]
        %v497 = vld [vmem:[%s493 + $0x18] sm:$0xff]
        %v498 = vld [vmem:[%s493 + $0x20] sm:$0xff]
        %v499 = vld [vmem:[%s493 + $0x28] sm:$0xff]
        %v500 = vld [vmem:[%s493 + $0x30] sm:$0xff]
        %v501 = vld [vmem:[%s493 + $0x38] sm:$0xff]
        %v502 = vld [vmem:[%s493 + $0x40] sm:$0xff]
        %v503 = vld [vmem:[%s493 + $0x48] sm:$0xff]
        %v504 = vld [vmem:[%s493 + $0x50] sm:$0xff]
        %v505 = vld [vmem:[%s493 + $0x58] sm:$0xff]
        %v506 = vld [vmem:[%s493 + $0x60] sm:$0xff]
        %v507 = vld [vmem:[%s493 + $0x68] sm:$0xff]
        %v508 = vld [vmem:[%s493 + $0x70] sm:$0xff]
        %v509 = vld [vmem:[%s493 + $0x78] sm:$0xff]
        %v510 = vld [vmem:[%s493 + $0x80] sm:$0xff]
        %v511 = vld [vmem:[%s493 + $0x88] sm:$0xff]
        %v512 = vld [vmem:[%s493 + $0x90] sm:$0xff]
        %v513 = vld [vmem:[%s493 + $0x98] sm:$0xff]
        %v514 = vld [vmem:[%s493 + $0xa0] sm:$0xff]
        %v515 = vld [vmem:[%s493 + $0xa8] sm:$0xff]
        %v516 = vld [vmem:[%s493 + $0xb0] sm:$0xff]
        %v517 = vld [vmem:[%s493 + $0xb8] sm:$0xff]
        %v518 = vld [vmem:[%s493 + $0xc0] sm:$0xff]
        %v519 = vld [vmem:[%s493 + $0xc8] sm:$0xff]
        %v520 = vld [vmem:[%s493 + $0xd0] sm:$0xff]
        %v521 = vld [vmem:[%s493 + $0xd8] sm:$0xff]
        %v522 = vld [vmem:[%s493 + $0xe0] sm:$0xff]
        %v523 = vld [vmem:[%s493 + $0xe8] sm:$0xff]
        %v524 = vlaneseq
        %v525 = vshrl.u32 %v524, 7
        %v526 = vsub.s32 1, %v525
        %v527 = vrot.slane %v451, %v526
        %v528 = vmul.f32 %v441, %v527
        %v529 = vmul.f32 %v442, %v527
        %v530 = vmul.f32 %v461, %v527
        %v531 = vmul.f32 %v462, %v527
        %v532 = vmul.f32 %v463, %v527
        %v533 = vmul.f32 %v464, %v527
        %v534 = vmul.f32 %v465, %v527
        %v535 = vmul.f32 %v466, %v527
        %v536 = vmul.f32 %v467, %v527
        %v537 = vmul.f32 %v468, %v527
        %v538 = vmul.f32 %v469, %v527
        %v539 = vmul.f32 %v470, %v527
        %v540 = vmul.f32 %v471, %v527
        %v541 = vmul.f32 %v472, %v527
        %v542 = vmul.f32 %v473, %v527
        %v543 = vmul.f32 %v474, %v527
        %v544 = vmul.f32 %v475, %v527
        %v545 = vmul.f32 %v476, %v527
        %v546 = vmul.f32 %v477, %v527
        %v547 = vmul.f32 %v478, %v527
        %v548 = vmul.f32 %v479, %v527
        %v549 = vmul.f32 %v480, %v527
        %v550 = vmul.f32 %v481, %v527
        %v551 = vmul.f32 %v482, %v527
        %v552 = vmul.f32 %v483, %v527
        %v553 = vmul.f32 %v484, %v527
        %v554 = vmul.f32 %v485, %v527
        %v555 = vmul.f32 %v486, %v527
        %v556 = vmul.f32 %v487, %v527
        %v557 = vmul.f32 %v488, %v527
        %v558 = vmul.f32 %v489, %v527
        %v559 = vmul.f32 %v490, %v527
        %v560 = vlaneseq
        %v561 = vshrl.u32 %v560, 7
        %v562 = vsub.s32 4, %v561
        %v563 = vrot.slane %v451, %v562
        %v564 = vmul.f32 %v461, %v563
        %v565 = vmul.f32 %v462, %v563
        %v566 = vmul.f32 %v463, %v563
        %v567 = vmul.f32 %v464, %v563
        %v568 = vmul.f32 %v465, %v563
        %v569 = vmul.f32 %v466, %v563
        %v570 = vmul.f32 %v467, %v563
        %v571 = vmul.f32 %v468, %v563
        %v572 = vmul.f32 %v469, %v563
        %v573 = vmul.f32 %v470, %v563
        %v574 = vmul.f32 %v471, %v563
        %v575 = vmul.f32 %v472, %v563
        %v576 = vmul.f32 %v473, %v563
        %v577 = vmul.f32 %v474, %v563
        %v578 = vmul.f32 %v475, %v563
        %v579 = vmul.f32 %v476, %v563
        %v580 = vmul.f32 %v477, %v563
        %v581 = vmul.f32 %v478, %v563
        %v582 = vmul.f32 %v479, %v563
        %v583 = vmul.f32 %v480, %v563
        %v584 = vmul.f32 %v481, %v563
        %v585 = vmul.f32 %v482, %v563
        %v586 = vmul.f32 %v483, %v563
        %v587 = vmul.f32 %v484, %v563
        %v588 = vmul.f32 %v485, %v563
        %v589 = vmul.f32 %v486, %v563
        %v590 = vmul.f32 %v487, %v563
        %v591 = vmul.f32 %v488, %v563
        %v592 = vmul.f32 %v489, %v563
        %v593 = vmul.f32 %v490, %v563
        %v594 = vmul.f32 %v491, %v563
        %v595 = vmul.f32 %v492, %v563
        %v596 = vadd.f32 %v528, %v564
        %v597 = vadd.f32 %v529, %v565
        %v598 = vadd.f32 %v530, %v566
        %v599 = vadd.f32 %v531, %v567
        %v600 = vadd.f32 %v532, %v568
        %v601 = vadd.f32 %v533, %v569
        %v602 = vadd.f32 %v534, %v570
        %v603 = vadd.f32 %v535, %v571
        %v604 = vadd.f32 %v536, %v572
        %v605 = vadd.f32 %v537, %v573
        %v606 = vadd.f32 %v538, %v574
        %v607 = vadd.f32 %v539, %v575
        %v608 = vadd.f32 %v540, %v576
        %v609 = vadd.f32 %v541, %v577
        %v610 = vadd.f32 %v542, %v578
        %v611 = vadd.f32 %v543, %v579
        %v612 = vadd.f32 %v544, %v580
        %v613 = vadd.f32 %v545, %v581
        %v614 = vadd.f32 %v546, %v582
        %v615 = vadd.f32 %v547, %v583
        %v616 = vadd.f32 %v548, %v584
        %v617 = vadd.f32 %v549, %v585
        %v618 = vadd.f32 %v550, %v586
        %v619 = vadd.f32 %v551, %v587
        %v620 = vadd.f32 %v552, %v588
        %v621 = vadd.f32 %v553, %v589
        %v622 = vadd.f32 %v554, %v590
        %v623 = vadd.f32 %v555, %v591
        %v624 = vadd.f32 %v556, %v592
        %v625 = vadd.f32 %v557, %v593
        %v626 = vadd.f32 %v558, %v594
        %v627 = vadd.f32 %v559, %v595
        %v628 = vlaneseq
        %v629 = vshrl.u32 %v628, 7
        %v630 = vsub.s32 7, %v629
        %v631 = vrot.slane %v451, %v630
        %v632 = vmul.f32 %v494, %v631
        %v633 = vmul.f32 %v495, %v631
        %v634 = vmul.f32 %v496, %v631
        %v635 = vmul.f32 %v497, %v631
        %v636 = vmul.f32 %v498, %v631
        %v637 = vmul.f32 %v499, %v631
        %v638 = vmul.f32 %v500, %v631
        %v639 = vmul.f32 %v501, %v631
        %v640 = vmul.f32 %v502, %v631
        %v641 = vmul.f32 %v503, %v631
        %v642 = vmul.f32 %v504, %v631
        %v643 = vmul.f32 %v505, %v631
        %v644 = vmul.f32 %v506, %v631
        %v645 = vmul.f32 %v507, %v631
        %v646 = vmul.f32 %v508, %v631
        %v647 = vmul.f32 %v509, %v631
        %v648 = vmul.f32 %v510, %v631
        %v649 = vmul.f32 %v511, %v631
        %v650 = vmul.f32 %v512, %v631
        %v651 = vmul.f32 %v513, %v631
        %v652 = vmul.f32 %v514, %v631
        %v653 = vmul.f32 %v515, %v631
        %v654 = vmul.f32 %v516, %v631
        %v655 = vmul.f32 %v517, %v631
        %v656 = vmul.f32 %v518, %v631
        %v657 = vmul.f32 %v519, %v631
        %v658 = vmul.f32 %v520, %v631
        %v659 = vmul.f32 %v521, %v631
        %v660 = vmul.f32 %v522, %v631
        %v661 = vmul.f32 %v523, %v631
        %v662 = vmul.f32 %v449, %v631
        %v663 = vmul.f32 %v450, %v631
        %v664 = vadd.f32 %v596, %v632
        %v665 = vadd.f32 %v597, %v633
        %v666 = vadd.f32 %v598, %v634
        %v667 = vadd.f32 %v599, %v635
        %v668 = vadd.f32 %v600, %v636
        %v669 = vadd.f32 %v601, %v637
        %v670 = vadd.f32 %v602, %v638
        %v671 = vadd.f32 %v603, %v639
        %v672 = vadd.f32 %v604, %v640
        %v673 = vadd.f32 %v605, %v641
        %v674 = vadd.f32 %v606, %v642
        %v675 = vadd.f32 %v607, %v643
        %v676 = vadd.f32 %v608, %v644
        %v677 = vadd.f32 %v609, %v645
        %v678 = vadd.f32 %v610, %v646
        %v679 = vadd.f32 %v611, %v647
        %v680 = vadd.f32 %v612, %v648
        %v681 = vadd.f32 %v613, %v649
        %v682 = vadd.f32 %v614, %v650
        %v683 = vadd.f32 %v615, %v651
        %v684 = vadd.f32 %v616, %v652
        %v685 = vadd.f32 %v617, %v653
        %v686 = vadd.f32 %v618, %v654
        %v687 = vadd.f32 %v619, %v655
        %v688 = vadd.f32 %v620, %v656
        %v689 = vadd.f32 %v621, %v657
        %v690 = vadd.f32 %v622, %v658
        %v691 = vadd.f32 %v623, %v659
        %v692 = vadd.f32 %v624, %v660
        %v693 = vadd.f32 %v625, %v661
        %v694 = vadd.f32 %v626, %v662
        %v695 = vadd.f32 %v627, %v663
        %v696 = vlaneseq
        %v697 = vshrl.u32 %v696, 7
        %v698 = vsub.s32 0, %v697
        %v699 = vrot.slane %v451, %v698
        %v700 = vmul.f32 %v441, %v699
        %v701 = vmul.f32 %v442, %v699
        %v702 = vmul.f32 %v461, %v699
        %v703 = vmul.f32 %v462, %v699
        %v704 = vmul.f32 %v463, %v699
        %v705 = vmul.f32 %v464, %v699
        %v706 = vmul.f32 %v465, %v699
        %v707 = vmul.f32 %v466, %v699
        %v708 = vmul.f32 %v467, %v699
        %v709 = vmul.f32 %v468, %v699
        %v710 = vmul.f32 %v469, %v699
        %v711 = vmul.f32 %v470, %v699
        %v712 = vmul.f32 %v471, %v699
        %v713 = vmul.f32 %v472, %v699
        %v714 = vmul.f32 %v473, %v699
        %v715 = vmul.f32 %v474, %v699
        %v716 = vmul.f32 %v475, %v699
        %v717 = vmul.f32 %v476, %v699
        %v718 = vmul.f32 %v477, %v699
        %v719 = vmul.f32 %v478, %v699
        %v720 = vmul.f32 %v479, %v699
        %v721 = vmul.f32 %v480, %v699
        %v722 = vmul.f32 %v481, %v699
        %v723 = vmul.f32 %v482, %v699
        %v724 = vmul.f32 %v483, %v699
        %v725 = vmul.f32 %v484, %v699
        %v726 = vmul.f32 %v485, %v699
        %v727 = vmul.f32 %v486, %v699
        %v728 = vmul.f32 %v487, %v699
        %v729 = vmul.f32 %v488, %v699
        %v730 = vmul.f32 %v489, %v699
        %v731 = vmul.f32 %v490, %v699
        %v732 = vlaneseq
        %v733 = vshrl.u32 %v732, 7
        %v734 = vsub.s32 3, %v733
        %v735 = vrot.slane %v451, %v734
        %v736 = vmul.f32 %v461, %v735
        %v737 = vmul.f32 %v462, %v735
        %v738 = vmul.f32 %v463, %v735
        %v739 = vmul.f32 %v464, %v735
        %v740 = vmul.f32 %v465, %v735
        %v741 = vmul.f32 %v466, %v735
        %v742 = vmul.f32 %v467, %v735
        %v743 = vmul.f32 %v468, %v735
        %v744 = vmul.f32 %v469, %v735
        %v745 = vmul.f32 %v470, %v735
        %v746 = vmul.f32 %v471, %v735
        %v747 = vmul.f32 %v472, %v735
        %v748 = vmul.f32 %v473, %v735
        %v749 = vmul.f32 %v474, %v735
        %v750 = vmul.f32 %v475, %v735
        %v751 = vmul.f32 %v476, %v735
        %v752 = vmul.f32 %v477, %v735
        %v753 = vmul.f32 %v478, %v735
        %v754 = vmul.f32 %v479, %v735
        %v755 = vmul.f32 %v480, %v735
        %v756 = vmul.f32 %v481, %v735
        %v757 = vmul.f32 %v482, %v735
        %v758 = vmul.f32 %v483, %v735
        %v759 = vmul.f32 %v484, %v735
        %v760 = vmul.f32 %v485, %v735
        %v761 = vmul.f32 %v486, %v735
        %v762 = vmul.f32 %v487, %v735
        %v763 = vmul.f32 %v488, %v735
        %v764 = vmul.f32 %v489, %v735
        %v765 = vmul.f32 %v490, %v735
        %v766 = vmul.f32 %v491, %v735
        %v767 = vmul.f32 %v492, %v735
        %v768 = vadd.f32 %v700, %v736
        %v769 = vadd.f32 %v701, %v737
        %v770 = vadd.f32 %v702, %v738
        %v771 = vadd.f32 %v703, %v739
        %v772 = vadd.f32 %v704, %v740
        %v773 = vadd.f32 %v705, %v741
        %v774 = vadd.f32 %v706, %v742
        %v775 = vadd.f32 %v707, %v743
        %v776 = vadd.f32 %v708, %v744
        %v777 = vadd.f32 %v709, %v745
        %v778 = vadd.f32 %v710, %v746
        %v779 = vadd.f32 %v711, %v747
        %v780 = vadd.f32 %v712, %v748
        %v781 = vadd.f32 %v713, %v749
        %v782 = vadd.f32 %v714, %v750
        %v783 = vadd.f32 %v715, %v751
        %v784 = vadd.f32 %v716, %v752
        %v785 = vadd.f32 %v717, %v753
        %v786 = vadd.f32 %v718, %v754
        %v787 = vadd.f32 %v719, %v755
        %v788 = vadd.f32 %v720, %v756
        %v789 = vadd.f32 %v721, %v757
        %v790 = vadd.f32 %v722, %v758
        %v791 = vadd.f32 %v723, %v759
        %v792 = vadd.f32 %v724, %v760
        %v793 = vadd.f32 %v725, %v761
        %v794 = vadd.f32 %v726, %v762
        %v795 = vadd.f32 %v727, %v763
        %v796 = vadd.f32 %v728, %v764
        %v797 = vadd.f32 %v729, %v765
        %v798 = vadd.f32 %v730, %v766
        %v799 = vadd.f32 %v731, %v767
        %v800 = vlaneseq
        %v801 = vshrl.u32 %v800, 7
        %v802 = vsub.s32 6, %v801
        %v803 = vrot.slane %v451, %v802
        %v804 = vmul.f32 %v494, %v803
        %v805 = vmul.f32 %v495, %v803
        %v806 = vmul.f32 %v496, %v803
        %v807 = vmul.f32 %v497, %v803
        %v808 = vmul.f32 %v498, %v803
        %v809 = vmul.f32 %v499, %v803
        %v810 = vmul.f32 %v500, %v803
        %v811 = vmul.f32 %v501, %v803
        %v812 = vmul.f32 %v502, %v803
        %v813 = vmul.f32 %v503, %v803
        %v814 = vmul.f32 %v504, %v803
        %v815 = vmul.f32 %v505, %v803
        %v816 = vmul.f32 %v506, %v803
        %v817 = vmul.f32 %v507, %v803
        %v818 = vmul.f32 %v508, %v803
        %v819 = vmul.f32 %v509, %v803
        %v820 = vmul.f32 %v510, %v803
        %v821 = vmul.f32 %v511, %v803
        %v822 = vmul.f32 %v512, %v803
        %v823 = vmul.f32 %v513, %v803
        %v824 = vmul.f32 %v514, %v803
        %v825 = vmul.f32 %v515, %v803
        %v826 = vmul.f32 %v516, %v803
        %v827 = vmul.f32 %v517, %v803
        %v828 = vmul.f32 %v518, %v803
        %v829 = vmul.f32 %v519, %v803
        %v830 = vmul.f32 %v520, %v803
        %v831 = vmul.f32 %v521, %v803
        %v832 = vmul.f32 %v522, %v803
        %v833 = vmul.f32 %v523, %v803
        %v834 = vmul.f32 %v449, %v803
        %v835 = vmul.f32 %v450, %v803
        %v836 = vadd.f32 %v768, %v804
        %v837 = vadd.f32 %v769, %v805
        %v838 = vadd.f32 %v770, %v806
        %v839 = vadd.f32 %v771, %v807
        %v840 = vadd.f32 %v772, %v808
        %v841 = vadd.f32 %v773, %v809
        %v842 = vadd.f32 %v774, %v810
        %v843 = vadd.f32 %v775, %v811
        %v844 = vadd.f32 %v776, %v812
        %v845 = vadd.f32 %v777, %v813
        %v846 = vadd.f32 %v778, %v814
        %v847 = vadd.f32 %v779, %v815
        %v848 = vadd.f32 %v780, %v816
        %v849 = vadd.f32 %v781, %v817
        %v850 = vadd.f32 %v782, %v818
        %v851 = vadd.f32 %v783, %v819
        %v852 = vadd.f32 %v784, %v820
        %v853 = vadd.f32 %v785, %v821
        %v854 = vadd.f32 %v786, %v822
        %v855 = vadd.f32 %v787, %v823
        %v856 = vadd.f32 %v788, %v824
        %v857 = vadd.f32 %v789, %v825
        %v858 = vadd.f32 %v790, %v826
        %v859 = vadd.f32 %v791, %v827
        %v860 = vadd.f32 %v792, %v828
        %v861 = vadd.f32 %v793, %v829
        %v862 = vadd.f32 %v794, %v830
        %v863 = vadd.f32 %v795, %v831
        %v864 = vadd.f32 %v796, %v832
        %v865 = vadd.f32 %v797, %v833
        %v866 = vadd.f32 %v798, %v834
        %v867 = vadd.f32 %v799, %v835
        %v868 = vlaneseq
        %v869 = vshrl.u32 %v868, 7
        %v870 = vsub.s32 2, %v869
        %v871 = vrot.slane %v451, %v870
        %v872 = vmul.f32 %v441, %v871
        %v873 = vmul.f32 %v442, %v871
        %v874 = vmul.f32 %v461, %v871
        %v875 = vmul.f32 %v462, %v871
        %v876 = vmul.f32 %v463, %v871
        %v877 = vmul.f32 %v464, %v871
        %v878 = vmul.f32 %v465, %v871
        %v879 = vmul.f32 %v466, %v871
        %v880 = vmul.f32 %v467, %v871
        %v881 = vmul.f32 %v468, %v871
        %v882 = vmul.f32 %v469, %v871
        %v883 = vmul.f32 %v470, %v871
        %v884 = vmul.f32 %v471, %v871
        %v885 = vmul.f32 %v472, %v871
        %v886 = vmul.f32 %v473, %v871
        %v887 = vmul.f32 %v474, %v871
        %v888 = vmul.f32 %v475, %v871
        %v889 = vmul.f32 %v476, %v871
        %v890 = vmul.f32 %v477, %v871
        %v891 = vmul.f32 %v478, %v871
        %v892 = vmul.f32 %v479, %v871
        %v893 = vmul.f32 %v480, %v871
        %v894 = vmul.f32 %v481, %v871
        %v895 = vmul.f32 %v482, %v871
        %v896 = vmul.f32 %v483, %v871
        %v897 = vmul.f32 %v484, %v871
        %v898 = vmul.f32 %v485, %v871
        %v899 = vmul.f32 %v486, %v871
        %v900 = vmul.f32 %v487, %v871
        %v901 = vmul.f32 %v488, %v871
        %v902 = vmul.f32 %v489, %v871
        %v903 = vmul.f32 %v490, %v871
        %v904 = vlaneseq
        %v905 = vshrl.u32 %v904, 7
        %v906 = vsub.s32 5, %v905
        %v907 = vrot.slane %v451, %v906
        %v908 = vmul.f32 %v461, %v907
        %v909 = vmul.f32 %v462, %v907
        %v910 = vmul.f32 %v463, %v907
        %v911 = vmul.f32 %v464, %v907
        %v912 = vmul.f32 %v465, %v907
        %v913 = vmul.f32 %v466, %v907
        %v914 = vmul.f32 %v467, %v907
        %v915 = vmul.f32 %v468, %v907
        %v916 = vmul.f32 %v469, %v907
        %v917 = vmul.f32 %v470, %v907
        %v918 = vmul.f32 %v471, %v907
        %v919 = vmul.f32 %v472, %v907
        %v920 = vmul.f32 %v473, %v907
        %v921 = vmul.f32 %v474, %v907
        %v922 = vmul.f32 %v475, %v907
        %v923 = vmul.f32 %v476, %v907
        %v924 = vmul.f32 %v477, %v907
        %v925 = vmul.f32 %v478, %v907
        %v926 = vmul.f32 %v479, %v907
        %v927 = vmul.f32 %v480, %v907
        %v928 = vmul.f32 %v481, %v907
        %v929 = vmul.f32 %v482, %v907
        %v930 = vmul.f32 %v483, %v907
        %v931 = vmul.f32 %v484, %v907
        %v932 = vmul.f32 %v485, %v907
        %v933 = vmul.f32 %v486, %v907
        %v934 = vmul.f32 %v487, %v907
        %v935 = vmul.f32 %v488, %v907
        %v936 = vmul.f32 %v489, %v907
        %v937 = vmul.f32 %v490, %v907
        %v938 = vmul.f32 %v491, %v907
        %v939 = vmul.f32 %v492, %v907
        %v940 = vadd.f32 %v872, %v908
        %v941 = vadd.f32 %v873, %v909
        %v942 = vadd.f32 %v874, %v910
        %v943 = vadd.f32 %v875, %v911
        %v944 = vadd.f32 %v876, %v912
        %v945 = vadd.f32 %v877, %v913
        %v946 = vadd.f32 %v878, %v914
        %v947 = vadd.f32 %v879, %v915
        %v948 = vadd.f32 %v880, %v916
        %v949 = vadd.f32 %v881, %v917
        %v950 = vadd.f32 %v882, %v918
        %v951 = vadd.f32 %v883, %v919
        %v952 = vadd.f32 %v884, %v920
        %v953 = vadd.f32 %v885, %v921
        %v954 = vadd.f32 %v886, %v922
        %v955 = vadd.f32 %v887, %v923
        %v956 = vadd.f32 %v888, %v924
        %v957 = vadd.f32 %v889, %v925
        %v958 = vadd.f32 %v890, %v926
        %v959 = vadd.f32 %v891, %v927
        %v960 = vadd.f32 %v892, %v928
        %v961 = vadd.f32 %v893, %v929
        %v962 = vadd.f32 %v894, %v930
        %v963 = vadd.f32 %v895, %v931
        %v964 = vadd.f32 %v896, %v932
        %v965 = vadd.f32 %v897, %v933
        %v966 = vadd.f32 %v898, %v934
        %v967 = vadd.f32 %v899, %v935
        %v968 = vadd.f32 %v900, %v936
        %v969 = vadd.f32 %v901, %v937
        %v970 = vadd.f32 %v902, %v938
        %v971 = vadd.f32 %v903, %v939
        %v972 = vlaneseq
        %v973 = vshrl.u32 %v972, 7
        %v974 = vsub.s32 0, %v973
        %v975 = vrot.slane %v452, %v974
        %v976 = vmul.f32 %v494, %v975
        %v977 = vmul.f32 %v495, %v975
        %v978 = vmul.f32 %v496, %v975
        %v979 = vmul.f32 %v497, %v975
        %v980 = vmul.f32 %v498, %v975
        %v981 = vmul.f32 %v499, %v975
        %v982 = vmul.f32 %v500, %v975
        %v983 = vmul.f32 %v501, %v975
        %v984 = vmul.f32 %v502, %v975
        %v985 = vmul.f32 %v503, %v975
        %v986 = vmul.f32 %v504, %v975
        %v987 = vmul.f32 %v505, %v975
        %v988 = vmul.f32 %v506, %v975
        %v989 = vmul.f32 %v507, %v975
        %v990 = vmul.f32 %v508, %v975
        %v991 = vmul.f32 %v509, %v975
        %v992 = vmul.f32 %v510, %v975
        %v993 = vmul.f32 %v511, %v975
        %v994 = vmul.f32 %v512, %v975
        %v995 = vmul.f32 %v513, %v975
        %v996 = vmul.f32 %v514, %v975
        %v997 = vmul.f32 %v515, %v975
        %v998 = vmul.f32 %v516, %v975
        %v999 = vmul.f32 %v517, %v975
        %v1000 = vmul.f32 %v518, %v975
        %v1001 = vmul.f32 %v519, %v975
        %v1002 = vmul.f32 %v520, %v975
        %v1003 = vmul.f32 %v521, %v975
        %v1004 = vmul.f32 %v522, %v975
        %v1005 = vmul.f32 %v523, %v975
        %v1006 = vmul.f32 %v449, %v975
        %v1007 = vmul.f32 %v450, %v975
        %v1008 = vadd.f32 %v940, %v976
        %v1009 = vadd.f32 %v941, %v977
        %v1010 = vadd.f32 %v942, %v978
        %v1011 = vadd.f32 %v943, %v979
        %v1012 = vadd.f32 %v944, %v980
        %v1013 = vadd.f32 %v945, %v981
        %v1014 = vadd.f32 %v946, %v982
        %v1015 = vadd.f32 %v947, %v983
        %v1016 = vadd.f32 %v948, %v984
        %v1017 = vadd.f32 %v949, %v985
        %v1018 = vadd.f32 %v950, %v986
        %v1019 = vadd.f32 %v951, %v987
        %v1020 = vadd.f32 %v952, %v988
        %v1021 = vadd.f32 %v953, %v989
        %v1022 = vadd.f32 %v954, %v990
        %v1023 = vadd.f32 %v955, %v991
        %v1024 = vadd.f32 %v956, %v992
        %v1025 = vadd.f32 %v957, %v993
        %v1026 = vadd.f32 %v958, %v994
        %v1027 = vadd.f32 %v959, %v995
        %v1028 = vadd.f32 %v960, %v996
        %v1029 = vadd.f32 %v961, %v997
        %v1030 = vadd.f32 %v962, %v998
        %v1031 = vadd.f32 %v963, %v999
        %v1032 = vadd.f32 %v964, %v1000
        %v1033 = vadd.f32 %v965, %v1001
        %v1034 = vadd.f32 %v966, %v1002
        %v1035 = vadd.f32 %v967, %v1003
        %v1036 = vadd.f32 %v968, %v1004
        %v1037 = vadd.f32 %v969, %v1005
        %v1038 = vadd.f32 %v970, %v1006
        %v1039 = vadd.f32 %v971, %v1007
        %v1040 = vrot.slane %v836, 7
        %v1041 = vrot.slane %v838, 7
        %v1042 = vrot.slane %v840, 7
        %v1043 = vrot.slane %v842, 7
        %v1044 = vrot.slane %v844, 7
        %v1045 = vrot.slane %v846, 7
        %v1046 = vrot.slane %v848, 7
        %v1047 = vrot.slane %v850, 7
        %v1048 = vrot.slane %v852, 7
        %v1049 = vrot.slane %v854, 7
        %v1050 = vrot.slane %v856, 7
        %v1051 = vrot.slane %v858, 7
        %v1052 = vrot.slane %v860, 7
        %v1053 = vrot.slane %v862, 7
        %v1054 = vrot.slane %v864, 7
        %v1055 = vrot.slane %v866, 7
        %v1056 = vrot.slane %v837, 7
        %v1057 = vrot.slane %v839, 7
        %v1058 = vrot.slane %v841, 7
        %v1059 = vrot.slane %v843, 7
        %v1060 = vrot.slane %v845, 7
        %v1061 = vrot.slane %v847, 7
        %v1062 = vrot.slane %v849, 7
        %v1063 = vrot.slane %v851, 7
        %v1064 = vrot.slane %v853, 7
        %v1065 = vrot.slane %v855, 7
        %v1066 = vrot.slane %v857, 7
        %v1067 = vrot.slane %v859, 7
        %v1068 = vrot.slane %v861, 7
        %v1069 = vrot.slane %v863, 7
        %v1070 = vrot.slane %v865, 7
        %v1071 = vrot.slane %v867, 7
        %vm1072 = vcmp.lt.s32.totalorder %v455, 1
        %v1073 = vsel %vm1072, %v1040, %v1056
        %v1074 = vsel %vm1072, %v1041, %v1057
        %v1075 = vsel %vm1072, %v1042, %v1058
        %v1076 = vsel %vm1072, %v1043, %v1059
        %v1077 = vsel %vm1072, %v1044, %v1060
        %v1078 = vsel %vm1072, %v1045, %v1061
        %v1079 = vsel %vm1072, %v1046, %v1062
        %v1080 = vsel %vm1072, %v1047, %v1063
        %v1081 = vsel %vm1072, %v1048, %v1064
        %v1082 = vsel %vm1072, %v1049, %v1065
        %v1083 = vsel %vm1072, %v1050, %v1066
        %v1084 = vsel %vm1072, %v1051, %v1067
        %v1085 = vsel %vm1072, %v1052, %v1068
        %v1086 = vsel %vm1072, %v1053, %v1069
        %v1087 = vsel %vm1072, %v1054, %v1070
        %v1088 = vsel %vm1072, %v1055, %v1071
        %v1089 = vsel %vm1072, %v1056, %v1040
        %v1090 = vsel %vm1072, %v1057, %v1041
        %v1091 = vsel %vm1072, %v1058, %v1042
        %v1092 = vsel %vm1072, %v1059, %v1043
        %v1093 = vsel %vm1072, %v1060, %v1044
        %v1094 = vsel %vm1072, %v1061, %v1045
        %v1095 = vsel %vm1072, %v1062, %v1046
        %v1096 = vsel %vm1072, %v1063, %v1047
        %v1097 = vsel %vm1072, %v1064, %v1048
        %v1098 = vsel %vm1072, %v1065, %v1049
        %v1099 = vsel %vm1072, %v1066, %v1050
        %v1100 = vsel %vm1072, %v1067, %v1051
        %v1101 = vsel %vm1072, %v1068, %v1052
        %v1102 = vsel %vm1072, %v1069, %v1053
        %v1103 = vsel %vm1072, %v1070, %v1054
        %v1104 = vsel %vm1072, %v1071, %v1055
        %v1105 = vsel %vm457, 1, 0
        %v1106 = vsel %vm458, 1, 0
        %vm1107 = vcmp.eq.s32.totalorder %v1105, 1
        %vm1108 = vcmp.eq.s32.totalorder %v1106, 1
        %v1109 = vsel %vm1107, 0.0, %v1089
        %v1110 = vsel %vm1108, 0.0, %v1073
        %v1111 = vsel %vm1107, 0.0, %v1090
        %v1112 = vsel %vm1108, 0.0, %v1074
        %v1113 = vsel %vm1107, 0.0, %v1091
        %v1114 = vsel %vm1108, 0.0, %v1075
        %v1115 = vsel %vm1107, 0.0, %v1092
        %v1116 = vsel %vm1108, 0.0, %v1076
        %v1117 = vsel %vm1107, 0.0, %v1093
        %v1118 = vsel %vm1108, 0.0, %v1077
        %v1119 = vsel %vm1107, 0.0, %v1094
        %v1120 = vsel %vm1108, 0.0, %v1078
        %v1121 = vsel %vm1107, 0.0, %v1095
        %v1122 = vsel %vm1108, 0.0, %v1079
        %v1123 = vsel %vm1107, 0.0, %v1096
        %v1124 = vsel %vm1108, 0.0, %v1080
        %v1125 = vsel %vm1107, 0.0, %v1097
        %v1126 = vsel %vm1108, 0.0, %v1081
        %v1127 = vsel %vm1107, 0.0, %v1098
        %v1128 = vsel %vm1108, 0.0, %v1082
        %v1129 = vsel %vm1107, 0.0, %v1099
        %v1130 = vsel %vm1108, 0.0, %v1083
        %v1131 = vsel %vm1107, 0.0, %v1100
        %v1132 = vsel %vm1108, 0.0, %v1084
        %v1133 = vsel %vm1107, 0.0, %v1101
        %v1134 = vsel %vm1108, 0.0, %v1085
        %v1135 = vsel %vm1107, 0.0, %v1102
        %v1136 = vsel %vm1108, 0.0, %v1086
        %v1137 = vsel %vm1107, 0.0, %v1103
        %v1138 = vsel %vm1108, 0.0, %v1087
        %v1139 = vsel %vm1107, 0.0, %v1104
        %v1140 = vsel %vm1108, 0.0, %v1088
        %v1141 = vadd.f32 %v664, %v1109
        %v1142 = vadd.f32 %v665, %v1110
        %v1143 = vadd.f32 %v666, %v1111
        %v1144 = vadd.f32 %v667, %v1112
        %v1145 = vadd.f32 %v668, %v1113
        %v1146 = vadd.f32 %v669, %v1114
        %v1147 = vadd.f32 %v670, %v1115
        %v1148 = vadd.f32 %v671, %v1116
        %v1149 = vadd.f32 %v672, %v1117
        %v1150 = vadd.f32 %v673, %v1118
        %v1151 = vadd.f32 %v674, %v1119
        %v1152 = vadd.f32 %v675, %v1120
        %v1153 = vadd.f32 %v676, %v1121
        %v1154 = vadd.f32 %v677, %v1122
        %v1155 = vadd.f32 %v678, %v1123
        %v1156 = vadd.f32 %v679, %v1124
        %v1157 = vadd.f32 %v680, %v1125
        %v1158 = vadd.f32 %v681, %v1126
        %v1159 = vadd.f32 %v682, %v1127
        %v1160 = vadd.f32 %v683, %v1128
        %v1161 = vadd.f32 %v684, %v1129
        %v1162 = vadd.f32 %v685, %v1130
        %v1163 = vadd.f32 %v686, %v1131
        %v1164 = vadd.f32 %v687, %v1132
        %v1165 = vadd.f32 %v688, %v1133
        %v1166 = vadd.f32 %v689, %v1134
        %v1167 = vadd.f32 %v690, %v1135
        %v1168 = vadd.f32 %v691, %v1136
        %v1169 = vadd.f32 %v692, %v1137
        %v1170 = vadd.f32 %v693, %v1138
        %v1171 = vadd.f32 %v694, %v1139
        %v1172 = vadd.f32 %v695, %v1140
        %v1173 = vrot.slane %v1008, 1
        %v1174 = vrot.slane %v1010, 1
        %v1175 = vrot.slane %v1012, 1
        %v1176 = vrot.slane %v1014, 1
        %v1177 = vrot.slane %v1016, 1
        %v1178 = vrot.slane %v1018, 1
        %v1179 = vrot.slane %v1020, 1
        %v1180 = vrot.slane %v1022, 1
        %v1181 = vrot.slane %v1024, 1
        %v1182 = vrot.slane %v1026, 1
        %v1183 = vrot.slane %v1028, 1
        %v1184 = vrot.slane %v1030, 1
        %v1185 = vrot.slane %v1032, 1
        %v1186 = vrot.slane %v1034, 1
        %v1187 = vrot.slane %v1036, 1
        %v1188 = vrot.slane %v1038, 1
        %v1189 = vrot.slane %v1009, 1
        %v1190 = vrot.slane %v1011, 1
        %v1191 = vrot.slane %v1013, 1
        %v1192 = vrot.slane %v1015, 1
        %v1193 = vrot.slane %v1017, 1
        %v1194 = vrot.slane %v1019, 1
        %v1195 = vrot.slane %v1021, 1
        %v1196 = vrot.slane %v1023, 1
        %v1197 = vrot.slane %v1025, 1
        %v1198 = vrot.slane %v1027, 1
        %v1199 = vrot.slane %v1029, 1
        %v1200 = vrot.slane %v1031, 1
        %v1201 = vrot.slane %v1033, 1
        %v1202 = vrot.slane %v1035, 1
        %v1203 = vrot.slane %v1037, 1
        %v1204 = vrot.slane %v1039, 1
        %vm1205 = vcmp.lt.s32.totalorder %v455, 7
        %v1206 = vsel %vm1205, %v1173, %v1189
        %v1207 = vsel %vm1205, %v1174, %v1190
        %v1208 = vsel %vm1205, %v1175, %v1191
        %v1209 = vsel %vm1205, %v1176, %v1192
        %v1210 = vsel %vm1205, %v1177, %v1193
        %v1211 = vsel %vm1205, %v1178, %v1194
        %v1212 = vsel %vm1205, %v1179, %v1195
        %v1213 = vsel %vm1205, %v1180, %v1196
        %v1214 = vsel %vm1205, %v1181, %v1197
        %v1215 = vsel %vm1205, %v1182, %v1198
        %v1216 = vsel %vm1205, %v1183, %v1199
        %v1217 = vsel %vm1205, %v1184, %v1200
        %v1218 = vsel %vm1205, %v1185, %v1201
        %v1219 = vsel %vm1205, %v1186, %v1202
        %v1220 = vsel %vm1205, %v1187, %v1203
        %v1221 = vsel %vm1205, %v1188, %v1204
        %v1222 = vsel %vm1205, %v1189, %v1173
        %v1223 = vsel %vm1205, %v1190, %v1174
        %v1224 = vsel %vm1205, %v1191, %v1175
        %v1225 = vsel %vm1205, %v1192, %v1176
        %v1226 = vsel %vm1205, %v1193, %v1177
        %v1227 = vsel %vm1205, %v1194, %v1178
        %v1228 = vsel %vm1205, %v1195, %v1179
        %v1229 = vsel %vm1205, %v1196, %v1180
        %v1230 = vsel %vm1205, %v1197, %v1181
        %v1231 = vsel %vm1205, %v1198, %v1182
        %v1232 = vsel %vm1205, %v1199, %v1183
        %v1233 = vsel %vm1205, %v1200, %v1184
        %v1234 = vsel %vm1205, %v1201, %v1185
        %v1235 = vsel %vm1205, %v1202, %v1186
        %v1236 = vsel %vm1205, %v1203, %v1187
        %v1237 = vsel %vm1205, %v1204, %v1188
        %v1238 = vsel %vm459, 1, 0
        %v1239 = vsel %vm460, 1, 0
        %vm1240 = vcmp.eq.s32.totalorder %v1238, 1
        %vm1241 = vcmp.eq.s32.totalorder %v1239, 1
        %v1242 = vsel %vm1240, 0.0, %v1206
        %v1243 = vsel %vm1241, 0.0, %v1222
        %v1244 = vsel %vm1240, 0.0, %v1207
        %v1245 = vsel %vm1241, 0.0, %v1223
        %v1246 = vsel %vm1240, 0.0, %v1208
        %v1247 = vsel %vm1241, 0.0, %v1224
        %v1248 = vsel %vm1240, 0.0, %v1209
        %v1249 = vsel %vm1241, 0.0, %v1225
        %v1250 = vsel %vm1240, 0.0, %v1210
        %v1251 = vsel %vm1241, 0.0, %v1226
        %v1252 = vsel %vm1240, 0.0, %v1211
        %v1253 = vsel %vm1241, 0.0, %v1227
        %v1254 = vsel %vm1240, 0.0, %v1212
        %v1255 = vsel %vm1241, 0.0, %v1228
        %v1256 = vsel %vm1240, 0.0, %v1213
        %v1257 = vsel %vm1241, 0.0, %v1229
        %v1258 = vsel %vm1240, 0.0, %v1214
        %v1259 = vsel %vm1241, 0.0, %v1230
        %v1260 = vsel %vm1240, 0.0, %v1215
        %v1261 = vsel %vm1241, 0.0, %v1231
        %v1262 = vsel %vm1240, 0.0, %v1216
        %v1263 = vsel %vm1241, 0.0, %v1232
        %v1264 = vsel %vm1240, 0.0, %v1217
        %v1265 = vsel %vm1241, 0.0, %v1233
        %v1266 = vsel %vm1240, 0.0, %v1218
        %v1267 = vsel %vm1241, 0.0, %v1234
        %v1268 = vsel %vm1240, 0.0, %v1219
        %v1269 = vsel %vm1241, 0.0, %v1235
        %v1270 = vsel %vm1240, 0.0, %v1220
        %v1271 = vsel %vm1241, 0.0, %v1236
        %v1272 = vsel %vm1240, 0.0, %v1221
        %v1273 = vsel %vm1241, 0.0, %v1237
        %v1274 = vadd.f32 %v1141, %v1242
        %v1275 = vadd.f32 %v1142, %v1243
        %v1276 = vadd.f32 %v1143, %v1244
        %v1277 = vadd.f32 %v1144, %v1245
        %v1278 = vadd.f32 %v1145, %v1246
        %v1279 = vadd.f32 %v1146, %v1247
        %v1280 = vadd.f32 %v1147, %v1248
        %v1281 = vadd.f32 %v1148, %v1249
        %v1282 = vadd.f32 %v1149, %v1250
        %v1283 = vadd.f32 %v1150, %v1251
        %v1284 = vadd.f32 %v1151, %v1252
        %v1285 = vadd.f32 %v1152, %v1253
        %v1286 = vadd.f32 %v1153, %v1254
        %v1287 = vadd.f32 %v1154, %v1255
        %v1288 = vadd.f32 %v1155, %v1256
        %v1289 = vadd.f32 %v1156, %v1257
        %v1290 = vadd.f32 %v1157, %v1258
        %v1291 = vadd.f32 %v1158, %v1259
        %v1292 = vadd.f32 %v1159, %v1260
        %v1293 = vadd.f32 %v1160, %v1261
        %v1294 = vadd.f32 %v1161, %v1262
        %v1295 = vadd.f32 %v1162, %v1263
        %v1296 = vadd.f32 %v1163, %v1264
        %v1297 = vadd.f32 %v1164, %v1265
        %v1298 = vadd.f32 %v1165, %v1266
        %v1299 = vadd.f32 %v1166, %v1267
        %v1300 = vadd.f32 %v1167, %v1268
        %v1301 = vadd.f32 %v1168, %v1269
        %v1302 = vadd.f32 %v1169, %v1270
        %v1303 = vadd.f32 %v1170, %v1271
        %v1304 = vadd.f32 %v1171, %v1272
        %v1305 = vadd.f32 %v1172, %v1273
        %v1307 = vlaneseq
        %v1308 = vshrl.u32 %v1307, 7
        %v1309 = vsub.s32 0, %v1308
        %v1310 = vrot.slane %v453, %v1309
        %v1312 = vadd.f32 %v1274, %v1310
        %v1313 = vadd.f32 %v1275, %v1310
        %v1314 = vadd.f32 %v1276, %v1310
        %v1315 = vadd.f32 %v1277, %v1310
        %v1316 = vadd.f32 %v1278, %v1310
        %v1317 = vadd.f32 %v1279, %v1310
        %v1318 = vadd.f32 %v1280, %v1310
        %v1319 = vadd.f32 %v1281, %v1310
        %v1320 = vadd.f32 %v1282, %v1310
        %v1321 = vadd.f32 %v1283, %v1310
        %v1322 = vadd.f32 %v1284, %v1310
        %v1323 = vadd.f32 %v1285, %v1310
        %v1324 = vadd.f32 %v1286, %v1310
        %v1325 = vadd.f32 %v1287, %v1310
        %v1326 = vadd.f32 %v1288, %v1310
        %v1327 = vadd.f32 %v1289, %v1310
        %v1328 = vadd.f32 %v1290, %v1310
        %v1329 = vadd.f32 %v1291, %v1310
        %v1330 = vadd.f32 %v1292, %v1310
        %v1331 = vadd.f32 %v1293, %v1310
        %v1332 = vadd.f32 %v1294, %v1310
        %v1333 = vadd.f32 %v1295, %v1310
        %v1334 = vadd.f32 %v1296, %v1310
        %v1335 = vadd.f32 %v1297, %v1310
        %v1336 = vadd.f32 %v1298, %v1310
        %v1337 = vadd.f32 %v1299, %v1310
        %v1338 = vadd.f32 %v1300, %v1310
        %v1339 = vadd.f32 %v1301, %v1310
        %v1340 = vadd.f32 %v1302, %v1310
        %v1341 = vadd.f32 %v1303, %v1310
        %v1342 = vadd.f32 %v1304, %v1310
        %v1343 = vadd.f32 %v1305, %v1310
        %vm1344 = vcmask 261120
        %1345 = vst.msk [vmem:[%s421] sm:$0xff] %vm1344, %v1312
        %1346 = vst.msk [vmem:[%s421 + $0x8] sm:$0xff] %vm1344, %v1313
        %1347 = vst.msk [vmem:[%s421 + $0x10] sm:$0xff] %vm1344, %v1314
        %1348 = vst.msk [vmem:[%s421 + $0x18] sm:$0xff] %vm1344, %v1315
        %1349 = vst.msk [vmem:[%s421 + $0x20] sm:$0xff] %vm1344, %v1316
        %1350 = vst.msk [vmem:[%s421 + $0x28] sm:$0xff] %vm1344, %v1317
        %1351 = vst.msk [vmem:[%s421 + $0x30] sm:$0xff] %vm1344, %v1318
        %1352 = vst.msk [vmem:[%s421 + $0x38] sm:$0xff] %vm1344, %v1319
        %1353 = vst.msk [vmem:[%s421 + $0x40] sm:$0xff] %vm1344, %v1320
        %1354 = vst.msk [vmem:[%s421 + $0x48] sm:$0xff] %vm1344, %v1321
        %1355 = vst.msk [vmem:[%s421 + $0x50] sm:$0xff] %vm1344, %v1322
        %1356 = vst.msk [vmem:[%s421 + $0x58] sm:$0xff] %vm1344, %v1323
        %1357 = vst.msk [vmem:[%s421 + $0x60] sm:$0xff] %vm1344, %v1324
        %1358 = vst.msk [vmem:[%s421 + $0x68] sm:$0xff] %vm1344, %v1325
        %1359 = vst.msk [vmem:[%s421 + $0x70] sm:$0xff] %vm1344, %v1326
        %1360 = vst.msk [vmem:[%s421 + $0x78] sm:$0xff] %vm1344, %v1327
        %1361 = vst.msk [vmem:[%s421 + $0x80] sm:$0xff] %vm1344, %v1328
        %1362 = vst.msk [vmem:[%s421 + $0x88] sm:$0xff] %vm1344, %v1329
        %1363 = vst.msk [vmem:[%s421 + $0x90] sm:$0xff] %vm1344, %v1330
        %1364 = vst.msk [vmem:[%s421 + $0x98] sm:$0xff] %vm1344, %v1331
        %1365 = vst.msk [vmem:[%s421 + $0xa0] sm:$0xff] %vm1344, %v1332
        %1366 = vst.msk [vmem:[%s421 + $0xa8] sm:$0xff] %vm1344, %v1333
        %1367 = vst.msk [vmem:[%s421 + $0xb0] sm:$0xff] %vm1344, %v1334
        %1368 = vst.msk [vmem:[%s421 + $0xb8] sm:$0xff] %vm1344, %v1335
        %1369 = vst.msk [vmem:[%s421 + $0xc0] sm:$0xff] %vm1344, %v1336
        %1370 = vst.msk [vmem:[%s421 + $0xc8] sm:$0xff] %vm1344, %v1337
        %1371 = vst.msk [vmem:[%s421 + $0xd0] sm:$0xff] %vm1344, %v1338
        %1372 = vst.msk [vmem:[%s421 + $0xd8] sm:$0xff] %vm1344, %v1339
        %1373 = vst.msk [vmem:[%s421 + $0xe0] sm:$0xff] %vm1344, %v1340
        %1374 = vst.msk [vmem:[%s421 + $0xe8] sm:$0xff] %vm1344, %v1341
        %1375 = vst.msk [vmem:[%s421 + $0xf0] sm:$0xff] %vm1344, %v1342
        %1376 = vst.msk [vmem:[%s421 + $0xf8] sm:$0xff] %vm1344, %v1343
        %s1377 = sand.u32 %s215, 1
        %s1378 = scalar_lea.sflag [#allocation4], %s1377
        %s1379 = sand.u32 %s215, 1
        %s1380 = smul.addr %s1379, 256
        %s1381 = scalar_lea.vmem [#allocation10], %s1380
        // Predicated region
        $region57: #{tpu_custom_call.1} parent=39 // pred_check
          %p1382 = pneg %p225
        $region58: #{tpu_custom_call.1} parent=39 // pred_check_branch
          %1384 = sbr.rel (%p1382) target = $region60
        $region59: #{tpu_custom_call.1} parent=39 // pred_region
          %s1385 = smul.u32 16, %s33
          %s1387 = ssub.s32 4096, 4096
          %1388 = vsyncadd %s1378, %s1387
          %s1389 = smul.addr %s1385, 2
          %s1390 = sadd.s32 %s32, %s1389
          %s1391 = smul.addr %s31, 32
          %s1392 = sadd.s32 %s1390, %s1391
          %s1393 = smul.addr %s1392, 128
          %s1394 = scalar_lea.hbm %s5, %s1393
          %s1395 = sshll.u32 %s1381, 4
          %s1396 = int_to_ptr.vmem [resolvable:$true] %s1395
          %1401 = dma.vmem_to_hbm [thread:$0]  %s1396, 4096, %s1394, %s1378, 128, 128, 8
        $region60: #{tpu_custom_call.1} parent=39 // pred_fallthru
          _
      $region40: #{tpu_custom_call.1} parent=5 // pred_fallthru
        _
      %p1402 = scmp.le.s32.totalorder 2, %s21
      // Predicated region
      $region61: #{tpu_custom_call.1} parent=5 // pred_check
        %p1403 = pneg %p1402
      $region62: #{tpu_custom_call.1} parent=5 // pred_check_branch
        %1405 = sbr.rel (%p1403) target = $region64
      $region63: #{tpu_custom_call.1} parent=5 // pred_region
        %s1406 = ssub.s32 %s21, 2
        // Predicated region
        $region65: #{tpu_custom_call.1} parent=63 // pred_check
          %p1407 = pneg %p231
        $region66: #{tpu_custom_call.1} parent=63 // pred_check_branch
          %1409 = sbr.rel (%p1407) target = $region68
        $region67: #{tpu_custom_call.1} parent=63 // pred_region
          %s1410 = sand.u32 %s216, 1
          %s1411 = scalar_lea.sflag [#allocation4], %s1410
          %s1412 = sand.u32 %s216, 1
          %s1413 = smul.addr %s1412, 256
          %s1414 = scalar_lea.vmem [#allocation10], %s1413
          %1415 = dma.done %s1411, 4096
        $region68: #{tpu_custom_call.1} parent=63 // pred_fallthru
          _
      $region64: #{tpu_custom_call.1} parent=5 // pred_fallthru
        _
    $region6: #{tpu_custom_call.1} parent=1 // loop_footer
      %s25 = sadd.s32 1, %s21
    $region7: #{tpu_custom_call.1} parent=1 // loop_footer_branch
      %20 = sbr.rel target = $region3
    $region8: #{tpu_custom_call.1} parent=1 // loop_exit
      _
    %1416 = vsyncpa [#allocation3], 1
    %s1417 = scalar_lea.sflag [#allocation3], 1
    %1418 = vsyncpa %s1417, 1
    %1419 = vsyncpa [#allocation6], 1
    %s1420 = scalar_lea.sflag [#allocation6], 1
    %1421 = vsyncpa %s1420, 1
    %1422 = vsyncpa [#allocation9], 1
    %1423 = vsyncpa [#allocation4], 1
    %s1424 = scalar_lea.sflag [#allocation4], 1
    %1425 = vsyncpa %s1424, 1

</llo_original>
